<compile_context>
chip_gen: v7x
topology: tpu7x:2x2x1
jax: 0.10.0
libtpu: 0.0.40
codegen_flags: <defaults>
</compile_context>

<pallas_src>
import functools

import jax
import jax.numpy as jnp
from jax.experimental import pallas as pl
from jax.experimental.pallas import tpu as pltpu


def _round_up(n, m):
    return ((n + m - 1) // m) * m


def _cdiv(a, b):
    return -(-a // b)


def _gelu_tanh(x):
    # tanh-approximate GELU: one EUP tanh + a few VALU ops.
    c = 0.7978845608028654
    return 0.5 * x * (1.0 + jnp.tanh(c * (x + 0.044715 * (x * x * x))))


def _layernorm(h, gamma, beta, n_valid, eps=1e-5):
    # PyTorch LayerNorm (biased variance, eps inside rsqrt) over the first
    # n_valid lanes. Padded lanes of `h` are exactly 0 on entry, so plain row
    # sums already equal the valid-lane sums; var = E[h^2] - mu^2 avoids the
    # masked re-centering pass entirely (review: trim VALU work).
    inv_n = 1.0 / float(n_valid)
    mu = jnp.sum(h, axis=-1, keepdims=True) * inv_n
    ex2 = jnp.sum(h * h, axis=-1, keepdims=True) * inv_n
    var = jnp.maximum(ex2 - mu * mu, 0.0)
    return (h - mu) * jax.lax.rsqrt(var + eps) * gamma + beta


def _residual_mlp_kernel(*refs, f_out, f_pad, mode):
    if mode == "fused":
        (x_ref, wc_ref, bc_ref, g1_ref, be1_ref,
         w2_ref, b2_ref, g2_ref, be2_ref, o_ref) = refs
    elif mode == "split":
        (x_ref, w1_ref, b1_ref, g1_ref, be1_ref,
         w2_ref, b2_ref, g2_ref, be2_ref, wp_ref, bp_ref, o_ref) = refs
    else:  # "noproj"
        (x_ref, w1_ref, b1_ref, g1_ref, be1_ref,
         w2_ref, b2_ref, g2_ref, be2_ref, o_ref) = refs

    x = x_ref[...]
    # bf16 MXU operands, f32 accumulation.  In "noproj" mode x arrives in f32
    # (it is also the residual); only the matmul LHS copy is down-cast.
    x_mm = x.astype(jnp.bfloat16) if mode == "noproj" else x

    if mode == "fused":
        # One 2*f_pad-wide MXU matmul computes linear1 and the projection.
        hc = jnp.dot(x_mm, wc_ref[...], preferred_element_type=jnp.float32) + bc_ref[...]
        h = hc[:, :f_pad]          # linear1 output    (padded lanes exactly 0)
        ident = hc[:, f_pad:]      # projection output (padded lanes exactly 0)
    else:
        h = jnp.dot(x_mm, w1_ref[...], preferred_element_type=jnp.float32) + b1_ref[...]

    # norm1 -> GELU   (dropout == identity in eval mode)
    h = _gelu_tanh(_layernorm(h, g1_ref[...], be1_ref[...], f_out))

    # linear2 -> norm2  (padded rows/cols of W2 are zero, so padded lanes of
    # the matmul2 output are exactly 0 again before LN2).
    h = jnp.dot(h.astype(jnp.bfloat16), w2_ref[...],
                preferred_element_type=jnp.float32) + b2_ref[...]
    h = _layernorm(h, g2_ref[...], be2_ref[...], f_out)

    if mode == "split":
        # Projection issued late: no tile_b x f_pad f32 buffer stays live
        # across LN1 -> GELU -> matmul2 -> LN2 (v7x 64 MiB/TC budget).
        ident = jnp.dot(x_mm, wp_ref[...],
                        preferred_element_type=jnp.float32) + bp_ref[...]
    elif mode == "noproj":
        ident = x  # identity residual, f32, feature axis already zero-padded

    # residual add -> GELU  (dropout identity)
    o_ref[...] = _gelu_tanh(h + ident).astype(o_ref.dtype)


# --------------------------------------------------------------------------
# Parameter preparation
# --------------------------------------------------------------------------

def init_params(key, in_features, out_features):
    """PyTorch-shaped params (weights pre-transposed to [in, out]; vectors
    stored as [1, out]).  Mirrors nn.Linear default init U(+-1/sqrt(fan_in))."""
    ks = jax.random.split(key, 6)
    k1 = 1.0 / jnp.sqrt(in_features)
    k2 = 1.0 / jnp.sqrt(out_features)
    u = lambda k, shape, lim: jax.random.uniform(k, shape, jnp.float32, -lim, lim)
    p = dict(
        w1=u(ks[0], (in_features, out_features), k1),
        b1=u(ks[1], (1, out_features), k1),
        g1=jnp.ones((1, out_features), jnp.float32),
        be1=jnp.zeros((1, out_features), jnp.float32),
        w2=u(ks[2], (out_features, out_features), k2),
        b2=u(ks[3], (1, out_features), k2),
        g2=jnp.ones((1, out_features), jnp.float32),
        be2=jnp.zeros((1, out_features), jnp.float32),
        wp=None, bp=None,
    )
    if in_features != out_features:       # module only has projection then
        p["wp"] = u(ks[4], (in_features, out_features), k1)
        p["bp"] = u(ks[5], (1, out_features), k1)
    return p


def prepare_params(p, *, fuse_max_fpad=512):
    """Zero-pad the out_features axis to a 128 multiple (lane-dense output),
    cast matmul weights to bf16, and pick the kernel mode:
      'noproj' : in_features == out_features -> identity residual, no Wp matmul
      'fused'  : small f_pad -> [W1|Wp] fused into one 2*f_pad-wide matmul
      'split'  : large f_pad -> projection matmul issued late (lower VMEM)"""
    in_features, out_features = p["w1"].shape
    f_pad = _round_up(out_features, 128)
    n = f_pad - out_features
    has_proj = p["wp"] is not None

    if has_proj:
        # Lane-dense K for the MXU LHS when f_in is ragged and not tiny.
        f_in_p = in_features if in_features < 128 else _round_up(in_features, 128)
    else:
        f_in_p = f_pad                      # x is padded alongside the out axis

    pad_cols = lambda v: jnp.pad(v, ((0, 0), (0, n)))

    out = dict(
        mode=None, f_in=in_features, f_out=out_features, f_pad=f_pad,
        # LayerNorm params stay f32; gamma padded with 0 so padded lanes stay 0.
        g1=pad_cols(p["g1"]), be1=pad_cols(p["be1"]),
        g2=pad_cols(p["g2"]), be2=pad_cols(p["be2"]),
        w2=jnp.pad(p["w2"], ((0, n), (0, n))).astype(jnp.bfloat16),
        b2=pad_cols(p["b2"]),
    )

    w1 = jnp.pad(p["w1"], ((0, f_in_p - in_features), (0, n)))
    b1 = pad_cols(p["b1"])

    if not has_proj:
        out.update(mode="noproj", w1=w1.astype(jnp.bfloat16), b1=b1)
        return out

    wp = jnp.pad(p["wp"], ((0, f_in_p - in_features), (0, n)))
    bp = pad_cols(p["bp"])
    if f_pad <= fuse_max_fpad:
        out.update(mode="fused",
                   wc=jnp.concatenate([w1, wp], axis=1).astype(jnp.bfloat16),
                   bc=jnp.concatenate([b1, bp], axis=1))
    else:
        out.update(mode="split",
                   w1=w1.astype(jnp.bfloat16), b1=b1,
                   wp=wp.astype(jnp.bfloat16), bp=bp)
    return out


# --------------------------------------------------------------------------
# Tiling / VMEM budgeting
# --------------------------------------------------------------------------

def _vmem_capacity_bytes():
    try:
        return int(pltpu.get_tpu_info().vmem_capacity_bytes)
    except Exception:
        return 64 * 1024 * 1024   # conservative default (v7x per-TensorCore)


def _choose_tiling(B, f_in_p, f_pad, mode, x_itemsize):
    """Balanced, VMEM-budgeted batch tiles; grid forced to an even count >= 2
    (when B allows) so both v7x cores get work under ('parallel',)."""
    vmem_cap = _vmem_capacity_bytes()
    vmem_limit = min(vmem_cap * 3 // 4, 100 * 1024 * 1024)

    # Grid-invariant (single-buffered) weight blocks.
    if mode == "fused":
        w_bytes = f_in_p * 2 * f_pad * 2
    elif mode == "split":
        w_bytes = 2 * f_in_p * f_pad * 2
    else:
        w_bytes = f_in_p * f_pad * 2
    w_bytes += f_pad * f_pad * 2 + 10 * f_pad * 4      # W2 + bias/LN vectors

    # Per-row bytes: double-buffered x tile + double-buffered f32 out tile +
    # conservative allowance for in-body f32 temporaries (hc/h/ident/...).
    temp_cols = 7 * f_pad if mode == "fused" else 6 * f_pad
    row_bytes = 2 * x_itemsize * f_in_p + 2 * 4 * f_pad + 4 * temp_cols

    granule = 16 if x_itemsize == 2 else 8              # bf16 sublane packing
    budget = max(int(vmem_limit * 0.7) - w_bytes, row_bytes * granule)
    tile_max = max(granule, min(4096, (budget // row_bytes) // granule * granule))

    grid = max(1, _cdiv(B, tile_max))
    if B >= 2 * granule:
        grid = max(grid, 2)          # let both v7x TensorCores work
        grid += grid % 2             # balanced split across the two cores
    tile_b = _round_up(_cdiv(B, grid), granule)
    return grid, tile_b, int(vmem_limit)


# --------------------------------------------------------------------------
# Wrapper
# --------------------------------------------------------------------------

def residual_mlp_block(x, params, *, interpret=False):
    """x: [B, in_features] float32.  params: dict from prepare_params().
    Returns [B, out_features] float32 (eval-mode forward)."""
    mode = params["mode"]
    f_out, f_pad = params["f_out"], params["f_pad"]
    B, f_in = x.shape
    assert f_in == params["f_in"], (f_in, params["f_in"])
    out_dtype = x.dtype

    if mode == "noproj":
        f_in_p = f_pad
        x_in = x                               # stays f32 (identity residual)
    else:
        f_in_p = (params["wc"] if mode == "fused" else params["w1"]).shape[0]
        # bf16 MXU LHS; in a real model this cast fuses into the producer op,
        # halving x's HBM traffic.
        x_in = x.astype(jnp.bfloat16)

    grid_n, tile_b, vmem_limit = _choose_tiling(
        B, f_in_p, f_pad, mode, jnp.dtype(x_in.dtype).itemsize)
    b_pad = grid_n * tile_b

    if b_pad != B or f_in_p != f_in:
        x_in = jnp.pad(x_in, ((0, b_pad - B), (0, f_in_p - f_in)))

    kernel = functools.partial(_residual_mlp_kernel,
                               f_out=f_out, f_pad=f_pad, mode=mode)

    def build(single_buffer):
        pm = dict(pipeline_mode=pl.Buffered(1)) if single_buffer else {}

        def const(shape):            # grid-invariant block, fetched once
            return pl.BlockSpec(shape, lambda i: (0, 0), **pm)

        vec = lambda: const((1, f_pad))
        x_spec = pl.BlockSpec((tile_b, f_in_p), lambda i: (i, 0))
        o_spec = pl.BlockSpec((tile_b, f_pad), lambda i: (i, 0))

        if mode == "fused":
            in_specs = [x_spec, const((f_in_p, 2 * f_pad)), const((1, 2 * f_pad)),
                        vec(), vec(), const((f_pad, f_pad)), vec(), vec(), vec()]
            operands = (x_in, params["wc"], params["bc"], params["g1"], params["be1"],
                        params["w2"], params["b2"], params["g2"], params["be2"])
        elif mode == "split":
            in_specs = [x_spec, const((f_in_p, f_pad)), vec(), vec(), vec(),
                        const((f_pad, f_pad)), vec(), vec(), vec(),
                        const((f_in_p, f_pad)), vec()]
            operands = (x_in, params["w1"], params["b1"], params["g1"], params["be1"],
                        params["w2"], params["b2"], params["g2"], params["be2"],
                        params["wp"], params["bp"])
        else:  # noproj
            in_specs = [x_spec, const((f_in_p, f_pad)), vec(), vec(), vec(),
                        const((f_pad, f_pad)), vec(), vec(), vec()]
            operands = (x_in, params["w1"], params["b1"], params["g1"], params["be1"],
                        params["w2"], params["b2"], params["g2"], params["be2"])
        return in_specs, o_spec, operands

    def call(single_buffer):
        in_specs, o_spec, operands = build(single_buffer)
        return pl.pallas_call(
            kernel,
            out_shape=jax.ShapeDtypeStruct((b_pad, f_pad), out_dtype),
            grid_spec=pltpu.PrefetchScalarGridSpec(
                num_scalar_prefetch=0,
                grid=(grid_n,),
                in_specs=in_specs,
                out_specs=o_spec,
            ),
            compiler_params=pltpu.CompilerParams(
                dimension_semantics=("parallel",),
                vmem_limit_bytes=vmem_limit,
            ),
            interpret=interpret,
        )(*operands)

    try:
        out = call(True)             # single-buffered invariant weight blocks
    except Exception:
        out = call(False)            # fallback: default double-buffered specs

    if b_pad != B or f_pad != f_out:
        out = out[:B, :f_out]
    return out


# --------------------------------------------------------------------------
# Pure-JAX reference + self-test
# --------------------------------------------------------------------------

def reference_forward(x, p, eps=1e-5, matmul_dtype=None):
    """Eval-mode reference (same tanh-GELU).  matmul_dtype=jnp.bfloat16
    emulates the kernel's bf16-in / f32-accumulate matmuls."""
    def mm(a, b):
        if matmul_dtype is not None:
            a, b = a.astype(matmul_dtype), b.astype(matmul_dtype)
        return jnp.dot(a, b, precision=jax.lax.Precision.HIGHEST,
                       preferred_element_type=jnp.float32)

    def ln(h, g, b):
        mu = jnp.mean(h, axis=-1, keepdims=True)
        var = jnp.mean((h - mu) ** 2, axis=-1, keepdims=True)
        return (h - mu) * jax.lax.rsqrt(var + eps) * g + b

    h = mm(x, p["w1"]) + p["b1"]
    h = _gelu_tanh(ln(h, p["g1"], p["be1"]))
    h = mm(h, p["w2"]) + p["b2"]
    h = ln(h, p["g2"], p["be2"])
    ident = x if p["wp"] is None else mm(x, p["wp"]) + p["bp"]
    return _gelu_tanh(h + ident)


if __name__ == "__main__":
    key = jax.random.PRNGKey(0)
    kx, kp, kp2 = jax.random.split(key, 3)

    # Case 1: in_features != out_features (projection path, fused [W1|Wp]).
    batch, in_features, out_features = 16, 32, 64
    x = jax.random.normal(kx, (batch, in_features), jnp.float32)
    raw = init_params(kp, in_features, out_features)
    prepped = prepare_params(raw)

    out = jax.block_until_ready(residual_mlp_block(x, prepped))
    assert out.shape == (batch, out_features)
    assert out.dtype == jnp.float32

    ref_bf16 = reference_forward(x, raw, matmul_dtype=jnp.bfloat16)
    ref_f32 = reference_forward(x, raw)
    err_tight = float(jnp.max(jnp.abs(out - ref_bf16)))
    err_loose = float(jnp.max(jnp.abs(out - ref_f32)))
    assert err_tight < 2e-2, err_tight     # plumbing vs bf16-emulating reference
    assert err_loose < 1.5e-1, err_loose   # sanity vs full-f32 module semantics

    # Case 2: in_features == out_features (identity residual, no projection).
    x2 = jax.random.normal(kx, (batch, out_features), jnp.float32)
    raw2 = init_params(kp2, out_features, out_features)
    prepped2 = prepare_params(raw2)

    out2 = jax.block_until_ready(residual_mlp_block(x2, prepped2))
    assert out2.shape == (batch, out_features)
    ref2_bf16 = reference_forward(x2, raw2, matmul_dtype=jnp.bfloat16)
    ref2_f32 = reference_forward(x2, raw2)
    err2_tight = float(jnp.max(jnp.abs(out2 - ref2_bf16)))
    err2_loose = float(jnp.max(jnp.abs(out2 - ref2_f32)))
    assert err2_tight < 2e-2, err2_tight
    assert err2_loose < 1.5e-1, err2_loose

    print("KERNEL_OK")
</pallas_src>

<mosaic_0001>
module attributes {stable_mosaic.version = 11 : i64} {
  func.func @_residual_mlp_kernel(%arg0: i32, %arg1: memref<16x32xbf16, #tpu.memory_space<vmem>>, %arg2: memref<32x256xbf16, #tpu.memory_space<vmem>>, %arg3: memref<1x256xf32, #tpu.memory_space<vmem>>, %arg4: memref<1x128xf32, #tpu.memory_space<vmem>>, %arg5: memref<1x128xf32, #tpu.memory_space<vmem>>, %arg6: memref<128x128xbf16, #tpu.memory_space<vmem>>, %arg7: memref<1x128xf32, #tpu.memory_space<vmem>>, %arg8: memref<1x128xf32, #tpu.memory_space<vmem>>, %arg9: memref<1x128xf32, #tpu.memory_space<vmem>>, %arg10: memref<16x128xf32, #tpu.memory_space<vmem>>) attributes {dimension_semantics = [#tpu.dimension_semantics<parallel>], iteration_bounds = array<i64: 1>, scalar_prefetch = 0 : i64, scratch_operands = 0 : i64, tpu.core_type = #tpu.core_type<tc>, window_params = [{transform_indices = @transform_0, window_bounds = array<i64: 16, 32>}, {pipeline_mode = #tpu.pipeline_mode<synchronous>, transform_indices = @transform_1, window_bounds = array<i64: 32, 256>}, {pipeline_mode = #tpu.pipeline_mode<synchronous>, transform_indices = @transform_2, window_bounds = array<i64: 1, 256>}, {pipeline_mode = #tpu.pipeline_mode<synchronous>, transform_indices = @transform_3, window_bounds = array<i64: 1, 128>}, {pipeline_mode = #tpu.pipeline_mode<synchronous>, transform_indices = @transform_4, window_bounds = array<i64: 1, 128>}, {pipeline_mode = #tpu.pipeline_mode<synchronous>, transform_indices = @transform_5, window_bounds = array<i64: 128, 128>}, {pipeline_mode = #tpu.pipeline_mode<synchronous>, transform_indices = @transform_6, window_bounds = array<i64: 1, 128>}, {pipeline_mode = #tpu.pipeline_mode<synchronous>, transform_indices = @transform_7, window_bounds = array<i64: 1, 128>}, {pipeline_mode = #tpu.pipeline_mode<synchronous>, transform_indices = @transform_8, window_bounds = array<i64: 1, 128>}, {transform_indices = @transform_9, window_bounds = array<i64: 16, 128>}]} {
    %c0 = arith.constant 0 : index
    %c0_0 = arith.constant 0 : index
    %0 = vector.load %arg1[%c0, %c0_0] : memref<16x32xbf16, #tpu.memory_space<vmem>>, vector<16x32xbf16>
    %c0_1 = arith.constant 0 : index
    %c0_2 = arith.constant 0 : index
    %1 = vector.load %arg2[%c0_1, %c0_2] : memref<32x256xbf16, #tpu.memory_space<vmem>>, vector<32x256xbf16>
    %cst = arith.constant dense<0.000000e+00> : vector<16x256xf32>
    %2 = tpu.matmul %0, %1, %cst {dimension_numbers = #tpu.dot_dimension_numbers<[1], [0], [0], [1], [0, 0, 1, 1], [], []>} : vector<16x32xbf16>, vector<32x256xbf16>, vector<16x256xf32> -> vector<16x256xf32>
    %c0_3 = arith.constant 0 : index
    %c0_4 = arith.constant 0 : index
    %3 = vector.load %arg3[%c0_3, %c0_4] : memref<1x256xf32, #tpu.memory_space<vmem>>, vector<1x256xf32>
    %4 = vector.broadcast %3 : vector<1x256xf32> to vector<16x256xf32>
    %5 = arith.addf %2, %4 : vector<16x256xf32>
    %6 = vector.extract_strided_slice %5 {offsets = [0, 0], sizes = [16, 128], strides = [1, 1]} : vector<16x256xf32> to vector<16x128xf32>
    %7 = vector.extract_strided_slice %5 {offsets = [0, 128], sizes = [16, 128], strides = [1, 1]} : vector<16x256xf32> to vector<16x128xf32>
    %c0_5 = arith.constant 0 : index
    %c0_6 = arith.constant 0 : index
    %8 = vector.load %arg4[%c0_5, %c0_6] : memref<1x128xf32, #tpu.memory_space<vmem>>, vector<1x128xf32>
    %c0_7 = arith.constant 0 : index
    %c0_8 = arith.constant 0 : index
    %9 = vector.load %arg5[%c0_7, %c0_8] : memref<1x128xf32, #tpu.memory_space<vmem>>, vector<1x128xf32>
    %cst_9 = arith.constant dense<0.000000e+00> : vector<16xf32>
    %10 = vector.multi_reduction <add>, %6, %cst_9 [1] : vector<16x128xf32> to vector<16xf32>
    %11 = vector.shape_cast %10 : vector<16xf32> to vector<16x1xf32>
    %cst_10 = arith.constant 1.562500e-02 : f32
    %12 = vector.broadcast %cst_10 : f32 to vector<16x1xf32>
    %13 = arith.mulf %11, %12 : vector<16x1xf32>
    %14 = arith.mulf %6, %6 : vector<16x128xf32>
    %cst_11 = arith.constant dense<0.000000e+00> : vector<16xf32>
    %15 = vector.multi_reduction <add>, %14, %cst_11 [1] : vector<16x128xf32> to vector<16xf32>
    %16 = vector.shape_cast %15 : vector<16xf32> to vector<16x1xf32>
    %cst_12 = arith.constant 1.562500e-02 : f32
    %17 = vector.broadcast %cst_12 : f32 to vector<16x1xf32>
    %18 = arith.mulf %16, %17 : vector<16x1xf32>
    %19 = arith.mulf %13, %13 : vector<16x1xf32>
    %20 = arith.subf %18, %19 : vector<16x1xf32>
    %cst_13 = arith.constant 0.000000e+00 : f32
    %21 = vector.broadcast %cst_13 : f32 to vector<16x1xf32>
    %22 = arith.maximumf %20, %21 : vector<16x1xf32>
    %23 = vector.broadcast %13 : vector<16x1xf32> to vector<16x128xf32>
    %24 = arith.subf %6, %23 : vector<16x128xf32>
    %cst_14 = arith.constant 9.99999974E-6 : f32
    %25 = vector.broadcast %cst_14 : f32 to vector<16x1xf32>
    %26 = arith.addf %22, %25 : vector<16x1xf32>
    %27 = math.rsqrt %26 : vector<16x1xf32>
    %28 = vector.broadcast %27 : vector<16x1xf32> to vector<16x128xf32>
    %29 = arith.mulf %24, %28 : vector<16x128xf32>
    %30 = vector.broadcast %8 : vector<1x128xf32> to vector<16x128xf32>
    %31 = arith.mulf %29, %30 : vector<16x128xf32>
    %32 = vector.broadcast %9 : vector<1x128xf32> to vector<16x128xf32>
    %33 = arith.addf %31, %32 : vector<16x128xf32>
    %cst_15 = arith.constant 5.000000e-01 : f32
    %34 = vector.broadcast %cst_15 : f32 to vector<16x128xf32>
    %35 = arith.mulf %34, %33 : vector<16x128xf32>
    %36 = arith.mulf %33, %33 : vector<16x128xf32>
    %37 = arith.mulf %36, %33 : vector<16x128xf32>
    %cst_16 = arith.constant 4.471500e-02 : f32
    %38 = vector.broadcast %cst_16 : f32 to vector<16x128xf32>
    %39 = arith.mulf %38, %37 : vector<16x128xf32>
    %40 = arith.addf %33, %39 : vector<16x128xf32>
    %cst_17 = arith.constant 0.797884583 : f32
    %41 = vector.broadcast %cst_17 : f32 to vector<16x128xf32>
    %42 = arith.mulf %41, %40 : vector<16x128xf32>
    %43 = math.tanh %42 : vector<16x128xf32>
    %cst_18 = arith.constant 1.000000e+00 : f32
    %44 = vector.broadcast %cst_18 : f32 to vector<16x128xf32>
    %45 = arith.addf %44, %43 : vector<16x128xf32>
    %46 = arith.mulf %35, %45 : vector<16x128xf32>
    %47 = arith.truncf %46 : vector<16x128xf32> to vector<16x128xbf16>
    %c0_19 = arith.constant 0 : index
    %c0_20 = arith.constant 0 : index
    %48 = vector.load %arg6[%c0_19, %c0_20] : memref<128x128xbf16, #tpu.memory_space<vmem>>, vector<128x128xbf16>
    %cst_21 = arith.constant dense<0.000000e+00> : vector<16x128xf32>
    %49 = tpu.matmul %47, %48, %cst_21 {dimension_numbers = #tpu.dot_dimension_numbers<[1], [0], [0], [1], [0, 0, 1, 1], [], []>} : vector<16x128xbf16>, vector<128x128xbf16>, vector<16x128xf32> -> vector<16x128xf32>
    %c0_22 = arith.constant 0 : index
    %c0_23 = arith.constant 0 : index
    %50 = vector.load %arg7[%c0_22, %c0_23] : memref<1x128xf32, #tpu.memory_space<vmem>>, vector<1x128xf32>
    %51 = vector.broadcast %50 : vector<1x128xf32> to vector<16x128xf32>
    %52 = arith.addf %49, %51 : vector<16x128xf32>
    %c0_24 = arith.constant 0 : index
    %c0_25 = arith.constant 0 : index
    %53 = vector.load %arg8[%c0_24, %c0_25] : memref<1x128xf32, #tpu.memory_space<vmem>>, vector<1x128xf32>
    %c0_26 = arith.constant 0 : index
    %c0_27 = arith.constant 0 : index
    %54 = vector.load %arg9[%c0_26, %c0_27] : memref<1x128xf32, #tpu.memory_space<vmem>>, vector<1x128xf32>
    %cst_28 = arith.constant dense<0.000000e+00> : vector<16xf32>
    %55 = vector.multi_reduction <add>, %52, %cst_28 [1] : vector<16x128xf32> to vector<16xf32>
    %56 = vector.shape_cast %55 : vector<16xf32> to vector<16x1xf32>
    %cst_29 = arith.constant 1.562500e-02 : f32
    %57 = vector.broadcast %cst_29 : f32 to vector<16x1xf32>
    %58 = arith.mulf %56, %57 : vector<16x1xf32>
    %59 = arith.mulf %52, %52 : vector<16x128xf32>
    %cst_30 = arith.constant dense<0.000000e+00> : vector<16xf32>
    %60 = vector.multi_reduction <add>, %59, %cst_30 [1] : vector<16x128xf32> to vector<16xf32>
    %61 = vector.shape_cast %60 : vector<16xf32> to vector<16x1xf32>
    %cst_31 = arith.constant 1.562500e-02 : f32
    %62 = vector.broadcast %cst_31 : f32 to vector<16x1xf32>
    %63 = arith.mulf %61, %62 : vector<16x1xf32>
    %64 = arith.mulf %58, %58 : vector<16x1xf32>
    %65 = arith.subf %63, %64 : vector<16x1xf32>
    %cst_32 = arith.constant 0.000000e+00 : f32
    %66 = vector.broadcast %cst_32 : f32 to vector<16x1xf32>
    %67 = arith.maximumf %65, %66 : vector<16x1xf32>
    %68 = vector.broadcast %58 : vector<16x1xf32> to vector<16x128xf32>
    %69 = arith.subf %52, %68 : vector<16x128xf32>
    %cst_33 = arith.constant 9.99999974E-6 : f32
    %70 = vector.broadcast %cst_33 : f32 to vector<16x1xf32>
    %71 = arith.addf %67, %70 : vector<16x1xf32>
    %72 = math.rsqrt %71 : vector<16x1xf32>
    %73 = vector.broadcast %72 : vector<16x1xf32> to vector<16x128xf32>
    %74 = arith.mulf %69, %73 : vector<16x128xf32>
    %75 = vector.broadcast %53 : vector<1x128xf32> to vector<16x128xf32>
    %76 = arith.mulf %74, %75 : vector<16x128xf32>
    %77 = vector.broadcast %54 : vector<1x128xf32> to vector<16x128xf32>
    %78 = arith.addf %76, %77 : vector<16x128xf32>
    %79 = arith.addf %78, %7 : vector<16x128xf32>
    %cst_34 = arith.constant 5.000000e-01 : f32
    %80 = vector.broadcast %cst_34 : f32 to vector<16x128xf32>
    %81 = arith.mulf %80, %79 : vector<16x128xf32>
    %82 = arith.mulf %79, %79 : vector<16x128xf32>
    %83 = arith.mulf %82, %79 : vector<16x128xf32>
    %cst_35 = arith.constant 4.471500e-02 : f32
    %84 = vector.broadcast %cst_35 : f32 to vector<16x128xf32>
    %85 = arith.mulf %84, %83 : vector<16x128xf32>
    %86 = arith.addf %79, %85 : vector<16x128xf32>
    %cst_36 = arith.constant 0.797884583 : f32
    %87 = vector.broadcast %cst_36 : f32 to vector<16x128xf32>
    %88 = arith.mulf %87, %86 : vector<16x128xf32>
    %89 = math.tanh %88 : vector<16x128xf32>
    %cst_37 = arith.constant 1.000000e+00 : f32
    %90 = vector.broadcast %cst_37 : f32 to vector<16x128xf32>
    %91 = arith.addf %90, %89 : vector<16x128xf32>
    %92 = arith.mulf %81, %91 : vector<16x128xf32>
    %c0_38 = arith.constant 0 : index
    %c0_39 = arith.constant 0 : index
    %93 = vector.load %arg10[%c0_38, %c0_39] : memref<16x128xf32, #tpu.memory_space<vmem>>, vector<16x128xf32>
    tpu.vector_store %arg10[%c0_38, %c0_39], %92 {strides = array<i32>} : memref<16x128xf32, #tpu.memory_space<vmem>>, vector<16x128xf32>,
    return
  }
  func.func @transform_0(%arg0: i32) -> (i32, i32) {
    %c0_i32 = arith.constant 0 : i32
    %c0_i32_0 = arith.constant 0 : i32
    return %arg0, %c0_i32 : i32, i32
  }
  func.func @transform_1(%arg0: i32) -> (i32, i32) {
    %c0_i32 = arith.constant 0 : i32
    %c0_i32_0 = arith.constant 0 : i32
    %c0_i32_1 = arith.constant 0 : i32
    return %c0_i32, %c0_i32_0 : i32, i32
  }
  func.func @transform_2(%arg0: i32) -> (i32, i32) {
    %c0_i32 = arith.constant 0 : i32
    %c0_i32_0 = arith.constant 0 : i32
    %c0_i32_1 = arith.constant 0 : i32
    return %c0_i32, %c0_i32_0 : i32, i32
  }
  func.func @transform_3(%arg0: i32) -> (i32, i32) {
    %c0_i32 = arith.constant 0 : i32
    %c0_i32_0 = arith.constant 0 : i32
    %c0_i32_1 = arith.constant 0 : i32
    return %c0_i32, %c0_i32_0 : i32, i32
  }
  func.func @transform_4(%arg0: i32) -> (i32, i32) {
    %c0_i32 = arith.constant 0 : i32
    %c0_i32_0 = arith.constant 0 : i32
    %c0_i32_1 = arith.constant 0 : i32
    return %c0_i32, %c0_i32_0 : i32, i32
  }
  func.func @transform_5(%arg0: i32) -> (i32, i32) {
    %c0_i32 = arith.constant 0 : i32
    %c0_i32_0 = arith.constant 0 : i32
    %c0_i32_1 = arith.constant 0 : i32
    return %c0_i32, %c0_i32_0 : i32, i32
  }
  func.func @transform_6(%arg0: i32) -> (i32, i32) {
    %c0_i32 = arith.constant 0 : i32
    %c0_i32_0 = arith.constant 0 : i32
    %c0_i32_1 = arith.constant 0 : i32
    return %c0_i32, %c0_i32_0 : i32, i32
  }
  func.func @transform_7(%arg0: i32) -> (i32, i32) {
    %c0_i32 = arith.constant 0 : i32
    %c0_i32_0 = arith.constant 0 : i32
    %c0_i32_1 = arith.constant 0 : i32
    return %c0_i32, %c0_i32_0 : i32, i32
  }
  func.func @transform_8(%arg0: i32) -> (i32, i32) {
    %c0_i32 = arith.constant 0 : i32
    %c0_i32_0 = arith.constant 0 : i32
    %c0_i32_1 = arith.constant 0 : i32
    return %c0_i32, %c0_i32_0 : i32, i32
  }
  func.func @transform_9(%arg0: i32) -> (i32, i32) {
    %c0_i32 = arith.constant 0 : i32
    %c0_i32_0 = arith.constant 0 : i32
    return %arg0, %c0_i32 : i32, i32
  }
}

module attributes {stable_mosaic.version = 11 : i64} {
  func.func @_residual_mlp_kernel(%arg0: i32, %arg1: memref<16x32xbf16, #tpu.memory_space<vmem>>, %arg2: memref<32x256xbf16, #tpu.memory_space<vmem>>, %arg3: memref<1x256xf32, #tpu.memory_space<vmem>>, %arg4: memref<1x128xf32, #tpu.memory_space<vmem>>, %arg5: memref<1x128xf32, #tpu.memory_space<vmem>>, %arg6: memref<128x128xbf16, #tpu.memory_space<vmem>>, %arg7: memref<1x128xf32, #tpu.memory_space<vmem>>, %arg8: memref<1x128xf32, #tpu.memory_space<vmem>>, %arg9: memref<1x128xf32, #tpu.memory_space<vmem>>, %arg10: memref<16x128xf32, #tpu.memory_space<vmem>>) attributes {dimension_semantics = [#tpu.dimension_semantics<parallel>], iteration_bounds = array<i64: 1>, scalar_prefetch = 0 : i64, scratch_operands = 0 : i64, tpu.core_type = #tpu.core_type<tc>, window_params = [{transform_indices = @transform_0, window_bounds = array<i64: 16, 32>}, {pipeline_mode = #tpu.pipeline_mode<synchronous>, transform_indices = @transform_1, window_bounds = array<i64: 32, 256>}, {pipeline_mode = #tpu.pipeline_mode<synchronous>, transform_indices = @transform_2, window_bounds = array<i64: 1, 256>}, {pipeline_mode = #tpu.pipeline_mode<synchronous>, transform_indices = @transform_3, window_bounds = array<i64: 1, 128>}, {pipeline_mode = #tpu.pipeline_mode<synchronous>, transform_indices = @transform_4, window_bounds = array<i64: 1, 128>}, {pipeline_mode = #tpu.pipeline_mode<synchronous>, transform_indices = @transform_5, window_bounds = array<i64: 128, 128>}, {pipeline_mode = #tpu.pipeline_mode<synchronous>, transform_indices = @transform_6, window_bounds = array<i64: 1, 128>}, {pipeline_mode = #tpu.pipeline_mode<synchronous>, transform_indices = @transform_7, window_bounds = array<i64: 1, 128>}, {pipeline_mode = #tpu.pipeline_mode<synchronous>, transform_indices = @transform_8, window_bounds = array<i64: 1, 128>}, {transform_indices = @transform_9, window_bounds = array<i64: 16, 128>}]} {
    %c0 = arith.constant 0 : index
    %c0_0 = arith.constant 0 : index
    %0 = vector.load %arg1[%c0, %c0_0] : memref<16x32xbf16, #tpu.memory_space<vmem>>, vector<16x32xbf16>
    %c0_1 = arith.constant 0 : index
    %c0_2 = arith.constant 0 : index
    %1 = vector.load %arg2[%c0_1, %c0_2] : memref<32x256xbf16, #tpu.memory_space<vmem>>, vector<32x256xbf16>
    %cst = arith.constant dense<0.000000e+00> : vector<16x256xf32>
    %2 = tpu.matmul %0, %1, %cst {dimension_numbers = #tpu.dot_dimension_numbers<[1], [0], [0], [1], [0, 0, 1, 1], [], []>} : vector<16x32xbf16>, vector<32x256xbf16>, vector<16x256xf32> -> vector<16x256xf32>
    %c0_3 = arith.constant 0 : index
    %c0_4 = arith.constant 0 : index
    %3 = vector.load %arg3[%c0_3, %c0_4] : memref<1x256xf32, #tpu.memory_space<vmem>>, vector<1x256xf32>
    %4 = vector.broadcast %3 : vector<1x256xf32> to vector<16x256xf32>
    %5 = arith.addf %2, %4 : vector<16x256xf32>
    %6 = vector.extract_strided_slice %5 {offsets = [0, 0], sizes = [16, 128], strides = [1, 1]} : vector<16x256xf32> to vector<16x128xf32>
    %7 = vector.extract_strided_slice %5 {offsets = [0, 128], sizes = [16, 128], strides = [1, 1]} : vector<16x256xf32> to vector<16x128xf32>
    %c0_5 = arith.constant 0 : index
    %c0_6 = arith.constant 0 : index
    %8 = vector.load %arg4[%c0_5, %c0_6] : memref<1x128xf32, #tpu.memory_space<vmem>>, vector<1x128xf32>
    %c0_7 = arith.constant 0 : index
    %c0_8 = arith.constant 0 : index
    %9 = vector.load %arg5[%c0_7, %c0_8] : memref<1x128xf32, #tpu.memory_space<vmem>>, vector<1x128xf32>
    %cst_9 = arith.constant dense<0.000000e+00> : vector<16xf32>
    %10 = vector.multi_reduction <add>, %6, %cst_9 [1] : vector<16x128xf32> to vector<16xf32>
    %11 = vector.shape_cast %10 : vector<16xf32> to vector<16x1xf32>
    %cst_10 = arith.constant 1.562500e-02 : f32
    %12 = vector.broadcast %cst_10 : f32 to vector<16x1xf32>
    %13 = arith.mulf %11, %12 : vector<16x1xf32>
    %14 = arith.mulf %6, %6 : vector<16x128xf32>
    %cst_11 = arith.constant dense<0.000000e+00> : vector<16xf32>
    %15 = vector.multi_reduction <add>, %14, %cst_11 [1] : vector<16x128xf32> to vector<16xf32>
    %16 = vector.shape_cast %15 : vector<16xf32> to vector<16x1xf32>
    %cst_12 = arith.constant 1.562500e-02 : f32
    %17 = vector.broadcast %cst_12 : f32 to vector<16x1xf32>
    %18 = arith.mulf %16, %17 : vector<16x1xf32>
    %19 = arith.mulf %13, %13 : vector<16x1xf32>
    %20 = arith.subf %18, %19 : vector<16x1xf32>
    %cst_13 = arith.constant 0.000000e+00 : f32
    %21 = vector.broadcast %cst_13 : f32 to vector<16x1xf32>
    %22 = arith.maximumf %20, %21 : vector<16x1xf32>
    %23 = vector.broadcast %13 : vector<16x1xf32> to vector<16x128xf32>
    %24 = arith.subf %6, %23 : vector<16x128xf32>
    %cst_14 = arith.constant 9.99999974E-6 : f32
    %25 = vector.broadcast %cst_14 : f32 to vector<16x1xf32>
    %26 = arith.addf %22, %25 : vector<16x1xf32>
    %27 = math.rsqrt %26 : vector<16x1xf32>
    %28 = vector.broadcast %27 : vector<16x1xf32> to vector<16x128xf32>
    %29 = arith.mulf %24, %28 : vector<16x128xf32>
    %30 = vector.broadcast %8 : vector<1x128xf32> to vector<16x128xf32>
    %31 = arith.mulf %29, %30 : vector<16x128xf32>
    %32 = vector.broadcast %9 : vector<1x128xf32> to vector<16x128xf32>
    %33 = arith.addf %31, %32 : vector<16x128xf32>
    %cst_15 = arith.constant 5.000000e-01 : f32
    %34 = vector.broadcast %cst_15 : f32 to vector<16x128xf32>
    %35 = arith.mulf %34, %33 : vector<16x128xf32>
    %36 = arith.mulf %33, %33 : vector<16x128xf32>
    %37 = arith.mulf %36, %33 : vector<16x128xf32>
    %cst_16 = arith.constant 4.471500e-02 : f32
    %38 = vector.broadcast %cst_16 : f32 to vector<16x128xf32>
    %39 = arith.mulf %38, %37 : vector<16x128xf32>
    %40 = arith.addf %33, %39 : vector<16x128xf32>
    %cst_17 = arith.constant 0.797884583 : f32
    %41 = vector.broadcast %cst_17 : f32 to vector<16x128xf32>
    %42 = arith.mulf %41, %40 : vector<16x128xf32>
    %43 = math.tanh %42 : vector<16x128xf32>
    %cst_18 = arith.constant 1.000000e+00 : f32
    %44 = vector.broadcast %cst_18 : f32 to vector<16x128xf32>
    %45 = arith.addf %44, %43 : vector<16x128xf32>
    %46 = arith.mulf %35, %45 : vector<16x128xf32>
    %47 = arith.truncf %46 : vector<16x128xf32> to vector<16x128xbf16>
    %c0_19 = arith.constant 0 : index
    %c0_20 = arith.constant 0 : index
    %48 = vector.load %arg6[%c0_19, %c0_20] : memref<128x128xbf16, #tpu.memory_space<vmem>>, vector<128x128xbf16>
    %cst_21 = arith.constant dense<0.000000e+00> : vector<16x128xf32>
    %49 = tpu.matmul %47, %48, %cst_21 {dimension_numbers = #tpu.dot_dimension_numbers<[1], [0], [0], [1], [0, 0, 1, 1], [], []>} : vector<16x128xbf16>, vector<128x128xbf16>, vector<16x128xf32> -> vector<16x128xf32>
    %c0_22 = arith.constant 0 : index
    %c0_23 = arith.constant 0 : index
    %50 = vector.load %arg7[%c0_22, %c0_23] : memref<1x128xf32, #tpu.memory_space<vmem>>, vector<1x128xf32>
    %51 = vector.broadcast %50 : vector<1x128xf32> to vector<16x128xf32>
    %52 = arith.addf %49, %51 : vector<16x128xf32>
    %c0_24 = arith.constant 0 : index
    %c0_25 = arith.constant 0 : index
    %53 = vector.load %arg8[%c0_24, %c0_25] : memref<1x128xf32, #tpu.memory_space<vmem>>, vector<1x128xf32>
    %c0_26 = arith.constant 0 : index
    %c0_27 = arith.constant 0 : index
    %54 = vector.load %arg9[%c0_26, %c0_27] : memref<1x128xf32, #tpu.memory_space<vmem>>, vector<1x128xf32>
    %cst_28 = arith.constant dense<0.000000e+00> : vector<16xf32>
    %55 = vector.multi_reduction <add>, %52, %cst_28 [1] : vector<16x128xf32> to vector<16xf32>
    %56 = vector.shape_cast %55 : vector<16xf32> to vector<16x1xf32>
    %cst_29 = arith.constant 1.562500e-02 : f32
    %57 = vector.broadcast %cst_29 : f32 to vector<16x1xf32>
    %58 = arith.mulf %56, %57 : vector<16x1xf32>
    %59 = arith.mulf %52, %52 : vector<16x128xf32>
    %cst_30 = arith.constant dense<0.000000e+00> : vector<16xf32>
    %60 = vector.multi_reduction <add>, %59, %cst_30 [1] : vector<16x128xf32> to vector<16xf32>
    %61 = vector.shape_cast %60 : vector<16xf32> to vector<16x1xf32>
    %cst_31 = arith.constant 1.562500e-02 : f32
    %62 = vector.broadcast %cst_31 : f32 to vector<16x1xf32>
    %63 = arith.mulf %61, %62 : vector<16x1xf32>
    %64 = arith.mulf %58, %58 : vector<16x1xf32>
    %65 = arith.subf %63, %64 : vector<16x1xf32>
    %cst_32 = arith.constant 0.000000e+00 : f32
    %66 = vector.broadcast %cst_32 : f32 to vector<16x1xf32>
    %67 = arith.maximumf %65, %66 : vector<16x1xf32>
    %68 = vector.broadcast %58 : vector<16x1xf32> to vector<16x128xf32>
    %69 = arith.subf %52, %68 : vector<16x128xf32>
    %cst_33 = arith.constant 9.99999974E-6 : f32
    %70 = vector.broadcast %cst_33 : f32 to vector<16x1xf32>
    %71 = arith.addf %67, %70 : vector<16x1xf32>
    %72 = math.rsqrt %71 : vector<16x1xf32>
    %73 = vector.broadcast %72 : vector<16x1xf32> to vector<16x128xf32>
    %74 = arith.mulf %69, %73 : vector<16x128xf32>
    %75 = vector.broadcast %53 : vector<1x128xf32> to vector<16x128xf32>
    %76 = arith.mulf %74, %75 : vector<16x128xf32>
    %77 = vector.broadcast %54 : vector<1x128xf32> to vector<16x128xf32>
    %78 = arith.addf %76, %77 : vector<16x128xf32>
    %79 = arith.addf %78, %7 : vector<16x128xf32>
    %cst_34 = arith.constant 5.000000e-01 : f32
    %80 = vector.broadcast %cst_34 : f32 to vector<16x128xf32>
    %81 = arith.mulf %80, %79 : vector<16x128xf32>
    %82 = arith.mulf %79, %79 : vector<16x128xf32>
    %83 = arith.mulf %82, %79 : vector<16x128xf32>
    %cst_35 = arith.constant 4.471500e-02 : f32
    %84 = vector.broadcast %cst_35 : f32 to vector<16x128xf32>
    %85 = arith.mulf %84, %83 : vector<16x128xf32>
    %86 = arith.addf %79, %85 : vector<16x128xf32>
    %cst_36 = arith.constant 0.797884583 : f32
    %87 = vector.broadcast %cst_36 : f32 to vector<16x128xf32>
    %88 = arith.mulf %87, %86 : vector<16x128xf32>
    %89 = math.tanh %88 : vector<16x128xf32>
    %cst_37 = arith.constant 1.000000e+00 : f32
    %90 = vector.broadcast %cst_37 : f32 to vector<16x128xf32>
    %91 = arith.addf %90, %89 : vector<16x128xf32>
    %92 = arith.mulf %81, %91 : vector<16x128xf32>
    %c0_38 = arith.constant 0 : index
    %c0_39 = arith.constant 0 : index
    %93 = vector.load %arg10[%c0_38, %c0_39] : memref<16x128xf32, #tpu.memory_space<vmem>>, vector<16x128xf32>
    tpu.vector_store %arg10[%c0_38, %c0_39], %92 {strides = array<i32>} : memref<16x128xf32, #tpu.memory_space<vmem>>, vector<16x128xf32>,
    return
  }
  func.func @transform_0(%arg0: i32) -> (i32, i32) {
    %c0_i32 = arith.constant 0 : i32
    %c0_i32_0 = arith.constant 0 : i32
    return %arg0, %c0_i32 : i32, i32
  }
  func.func @transform_1(%arg0: i32) -> (i32, i32) {
    %c0_i32 = arith.constant 0 : i32
    %c0_i32_0 = arith.constant 0 : i32
    %c0_i32_1 = arith.constant 0 : i32
    return %c0_i32, %c0_i32_0 : i32, i32
  }
  func.func @transform_2(%arg0: i32) -> (i32, i32) {
    %c0_i32 = arith.constant 0 : i32
    %c0_i32_0 = arith.constant 0 : i32
    %c0_i32_1 = arith.constant 0 : i32
    return %c0_i32, %c0_i32_0 : i32, i32
  }
  func.func @transform_3(%arg0: i32) -> (i32, i32) {
    %c0_i32 = arith.constant 0 : i32
    %c0_i32_0 = arith.constant 0 : i32
    %c0_i32_1 = arith.constant 0 : i32
    return %c0_i32, %c0_i32_0 : i32, i32
  }
  func.func @transform_4(%arg0: i32) -> (i32, i32) {
    %c0_i32 = arith.constant 0 : i32
    %c0_i32_0 = arith.constant 0 : i32
    %c0_i32_1 = arith.constant 0 : i32
    return %c0_i32, %c0_i32_0 : i32, i32
  }
  func.func @transform_5(%arg0: i32) -> (i32, i32) {
    %c0_i32 = arith.constant 0 : i32
    %c0_i32_0 = arith.constant 0 : i32
    %c0_i32_1 = arith.constant 0 : i32
    return %c0_i32, %c0_i32_0 : i32, i32
  }
  func.func @transform_6(%arg0: i32) -> (i32, i32) {
    %c0_i32 = arith.constant 0 : i32
    %c0_i32_0 = arith.constant 0 : i32
    %c0_i32_1 = arith.constant 0 : i32
    return %c0_i32, %c0_i32_0 : i32, i32
  }
  func.func @transform_7(%arg0: i32) -> (i32, i32) {
    %c0_i32 = arith.constant 0 : i32
    %c0_i32_0 = arith.constant 0 : i32
    %c0_i32_1 = arith.constant 0 : i32
    return %c0_i32, %c0_i32_0 : i32, i32
  }
  func.func @transform_8(%arg0: i32) -> (i32, i32) {
    %c0_i32 = arith.constant 0 : i32
    %c0_i32_0 = arith.constant 0 : i32
    %c0_i32_1 = arith.constant 0 : i32
    return %c0_i32, %c0_i32_0 : i32, i32
  }
  func.func @transform_9(%arg0: i32) -> (i32, i32) {
    %c0_i32 = arith.constant 0 : i32
    %c0_i32_0 = arith.constant 0 : i32
    return %arg0, %c0_i32 : i32, i32
  }
}

</mosaic_0001>

<llo_original>
// kernel: tpu_custom_call.1
$region0: #{tpu_custom_call.1}
  #allocation0 [shape = 'u32[]', space=smem, size = 0x4, offset = 0x4, fixed_abs, tag = 'smem constant byte address 0x4 - core index']
  #allocation1 [shape = 'u32[144,128]{1,0:T(1,128)}', space=vmem, size = 0x12000, scoped, tag = 'internal scratch']
  %s0 = inlined_call_operand.hbm [shape: bf16[16,32], index: 0, kind: input, shape index: {}]
  %s1 = inlined_call_operand.hbm [shape: bf16[32,256], index: 1, kind: input, shape index: {}]
  %s2 = inlined_call_operand.vmem [shape: f32[1,256], index: 2, kind: input, shape index: {}]
  %s3 = inlined_call_operand.vmem [shape: f32[1,128], index: 3, kind: input, shape index: {}]
  %s4 = inlined_call_operand.vmem [shape: f32[1,128], index: 4, kind: input, shape index: {}]
  %s5 = inlined_call_operand.hbm [shape: bf16[128,128], index: 5, kind: input, shape index: {}]
  %s6 = inlined_call_operand.vmem [shape: f32[1,128], index: 6, kind: input, shape index: {}]
  %s7 = inlined_call_operand.vmem [shape: f32[1,128], index: 7, kind: input, shape index: {}]
  %s8 = inlined_call_operand.vmem [shape: f32[1,128], index: 8, kind: input, shape index: {}]
  %s9 = inlined_call_operand.hbm [shape: f32[16,128], index: 9, kind: output, shape index: {}]
  %s10 = sld [smem:[#allocation0]]
  $region58: #{tpu_custom_call.1} parent=0
    _
  %s12 = ssub.s32 1, %s10
  %s13 = scalar_select 0, %s12, %s10
  $region1: #{tpu_custom_call.1} parent=0
    #allocation2 [shape = 'u8[4096]{0}', space=vmem, size = 0x1000, scoped, tag = 'input window, operand 0, single buffered']
    #allocation3 [shape = 's32[1]{0}', space=sflag, size = 0x4, scoped, tag = 'scoped memory for tpu_custom_call.1']
    #allocation4 [shape = 's32[1]{0}', space=sflag, size = 0x4, scoped, tag = 'scoped memory for tpu_custom_call.1']
    #allocation5 [shape = 'u8[16384]{0}', space=vmem, size = 0x4000, scoped, tag = 'input window, operand 1, single buffered']
    #allocation6 [shape = 's32[1]{0}', space=sflag, size = 0x4, scoped, tag = 'scoped memory for tpu_custom_call.1']
    #allocation7 [shape = 'u8[32768]{0}', space=vmem, size = 0x8000, scoped, tag = 'input window, operand 5, single buffered']
    #allocation8 [shape = 'u8[8192]{0}', space=vmem, size = 0x2000, scoped, tag = 'output window, operand 0, single buffered']
    %14 = vsyncpa [#allocation3], 0
    %15 = vsyncpa [#allocation6], 0
    %16 = vsyncpa [#allocation4], 0
    // Predicated region
    $region2: #{tpu_custom_call.1} parent=1 // pred_check
      _
    $region3: #{tpu_custom_call.1} parent=1 // pred_check_branch
      %18 = sbr.rel (0) target = $region5
    $region4: #{tpu_custom_call.1} parent=1 // pred_region
      %s20 = ssub.s32 128, 128
      %21 = vsyncadd [#allocation3], %s20
      %s22 = sshll.u32 [#allocation2], 4
      %s23 = int_to_ptr.vmem [resolvable:$true] %s22
      %28 = dma.hbm_to_vmem [thread:$0]  %s0, 128, %s23, [#allocation3], 64, 64, 4
    $region5: #{tpu_custom_call.1} parent=1 // pred_fallthru
      _
    // Predicated region
    $region6: #{tpu_custom_call.1} parent=1 // pred_check
      _
    $region7: #{tpu_custom_call.1} parent=1 // pred_check_branch
      %30 = sbr.rel (0) target = $region9
    $region8: #{tpu_custom_call.1} parent=1 // pred_region
      %s32 = ssub.s32 512, 512
      %33 = vsyncadd [#allocation6], %s32
      %s34 = sshll.u32 [#allocation5], 4
      %s35 = int_to_ptr.vmem [resolvable:$true] %s34
      %40 = dma.hbm_to_vmem [thread:$0]  %s1, 512, %s35, [#allocation6], 128, 128, 8
    $region9: #{tpu_custom_call.1} parent=1 // pred_fallthru
      _
    // Predicated region
    $region10: #{tpu_custom_call.1} parent=1 // pred_check
      _
    $region11: #{tpu_custom_call.1} parent=1 // pred_check_branch
      %42 = sbr.rel (0) target = $region13
    $region12: #{tpu_custom_call.1} parent=1 // pred_region
      _
    $region13: #{tpu_custom_call.1} parent=1 // pred_fallthru
      _
    // Predicated region
    $region14: #{tpu_custom_call.1} parent=1 // pred_check
      _
    $region15: #{tpu_custom_call.1} parent=1 // pred_check_branch
      %44 = sbr.rel (0) target = $region17
    $region16: #{tpu_custom_call.1} parent=1 // pred_region
      _
    $region17: #{tpu_custom_call.1} parent=1 // pred_fallthru
      _
    // Predicated region
    $region18: #{tpu_custom_call.1} parent=1 // pred_check
      _
    $region19: #{tpu_custom_call.1} parent=1 // pred_check_branch
      %46 = sbr.rel (0) target = $region21
    $region20: #{tpu_custom_call.1} parent=1 // pred_region
      _
    $region21: #{tpu_custom_call.1} parent=1 // pred_fallthru
      _
    // Predicated region
    $region22: #{tpu_custom_call.1} parent=1 // pred_check
      _
    $region23: #{tpu_custom_call.1} parent=1 // pred_check_branch
      %48 = sbr.rel (0) target = $region25
    $region24: #{tpu_custom_call.1} parent=1 // pred_region
      %s50 = ssub.s32 1024, 1024
      %51 = vsyncadd [#allocation6], %s50
      %s52 = sshll.u32 [#allocation7], 4
      %s53 = int_to_ptr.vmem [resolvable:$true] %s52
      %58 = dma.hbm_to_vmem [thread:$0]  %s5, 1024, %s53, [#allocation6], 64, 64, 4
    $region25: #{tpu_custom_call.1} parent=1 // pred_fallthru
      _
    // Predicated region
    $region26: #{tpu_custom_call.1} parent=1 // pred_check
      _
    $region27: #{tpu_custom_call.1} parent=1 // pred_check_branch
      %60 = sbr.rel (0) target = $region29
    $region28: #{tpu_custom_call.1} parent=1 // pred_region
      _
    $region29: #{tpu_custom_call.1} parent=1 // pred_fallthru
      _
    // Predicated region
    $region30: #{tpu_custom_call.1} parent=1 // pred_check
      _
    $region31: #{tpu_custom_call.1} parent=1 // pred_check_branch
      %62 = sbr.rel (0) target = $region33
    $region32: #{tpu_custom_call.1} parent=1 // pred_region
      _
    $region33: #{tpu_custom_call.1} parent=1 // pred_fallthru
      _
    // Predicated region
    $region34: #{tpu_custom_call.1} parent=1 // pred_check
      _
    $region35: #{tpu_custom_call.1} parent=1 // pred_check_branch
      %64 = sbr.rel (0) target = $region37
    $region36: #{tpu_custom_call.1} parent=1 // pred_region
      _
    $region37: #{tpu_custom_call.1} parent=1 // pred_fallthru
      _
    // Predicated region
    $region38: #{tpu_custom_call.1} parent=1 // pred_check
      _
    $region39: #{tpu_custom_call.1} parent=1 // pred_check_branch
      %66 = sbr.rel (0) target = $region41
    $region40: #{tpu_custom_call.1} parent=1 // pred_region
      %67 = dma.done [#allocation3], 128
    $region41: #{tpu_custom_call.1} parent=1 // pred_fallthru
      _
    // Predicated region
    $region42: #{tpu_custom_call.1} parent=1 // pred_check
      _
    $region43: #{tpu_custom_call.1} parent=1 // pred_check_branch
      %69 = sbr.rel (0) target = $region45
    $region44: #{tpu_custom_call.1} parent=1 // pred_region
      %70 = dma.done [#allocation6], 512
    $region45: #{tpu_custom_call.1} parent=1 // pred_fallthru
      _
    // Predicated region
    $region46: #{tpu_custom_call.1} parent=1 // pred_check
      _
    $region47: #{tpu_custom_call.1} parent=1 // pred_check_branch
      %72 = sbr.rel (0) target = $region49
    $region48: #{tpu_custom_call.1} parent=1 // pred_region
      %73 = dma.done [#allocation6], 1024
    $region49: #{tpu_custom_call.1} parent=1 // pred_fallthru
      _
    %v75 = vld [vmem:[#allocation2] sm:$0xf]
    %v76 = vld [vmem:[#allocation2 + $0x4] sm:$0xf]
    %v77 = vld [vmem:[#allocation5] sm:$0xff]
    %v78 = vld [vmem:[#allocation5 + $0x8] sm:$0xff]
    %v79 = vld [vmem:[#allocation5 + $0x10] sm:$0xff]
    %v80 = vld [vmem:[#allocation5 + $0x18] sm:$0xff]
    %v81 = vld [vmem:[%s2] sm:$0x3]
    %v83 = vlaneseq
    %v84 = vshrl.u32 %v83, 7
    %v85 = vsub.s32 0, %v84
    %v86 = vrot.slane %v81, %v85
    %v87 = vlaneseq
    %v88 = vshrl.u32 %v87, 7
    %v89 = vsub.s32 1, %v88
    %v90 = vrot.slane %v81, %v89
    %v95 = vunpack.c.l.b16 %v75
    %v96 = vunpack.c.l.b16 %v76
    %v97 = vpack.c.b16 %v96, %v95
    %v102 = vunpack.c.l.b16 %v77
    %v103 = vunpack.c.h.b16 %v77
    %v104 = vunpack.c.l.b16 %v78
    %v105 = vunpack.c.h.b16 %v78
    %v106 = vunpack.c.l.b16 %v79
    %v107 = vunpack.c.h.b16 %v79
    %v108 = vunpack.c.l.b16 %v80
    %v109 = vunpack.c.h.b16 %v80
    %v110 = vpack.c.b16 %v104, %v102
    %v111 = vpack.c.b16 %v105, %v103
    %v112 = vpack.c.b16 %v108, %v106
    %v113 = vpack.c.b16 %v109, %v107
    %vm118 = vcmask 261120
    %v120 = vsel %vm118, %v97, 0
    %122 = vmatprep.subr.bf16.mxu0 %v111
    %123 = vmatpush1.bf16.msra.mxu0 %v110
    %124 = vmatprep.subr.bf16.mxu0 %v113
    %125 = vmatpush1.bf16.msra.mxu0 %v112
    %126 = vmatprep.subr.bf16.mxu0 0
    %127 = vmatpush1.bf16.msra.mxu0 0
    %128 = vmatprep.subr.bf16.mxu0 0
    %129 = vmatpush1.bf16.msra.mxu0 0
    %130 = vmatprep.subr.bf16.mxu0 0
    %131 = vmatpush1.bf16.msra.mxu0 0
    %132 = vmatprep.subr.bf16.mxu0 0
    %133 = vmatpush1.bf16.msra.mxu0 0
    %134 = vmatprep.subr.bf16.mxu0 0
    %135 = vmatpush1.bf16.msra.mxu0 0
    %136 = vmatprep.subr.bf16.mxu0 0
    %137 = vmatpush1.bf16.msra.mxu0 0
    %138 = vmatprep.subr.bf16.mxu0 0
    %139 = vmatpush1.bf16.msra.mxu0 0
    %140 = vmatprep.subr.bf16.mxu0 0
    %141 = vmatpush1.bf16.msra.mxu0 0
    %142 = vmatprep.subr.bf16.mxu0 0
    %143 = vmatpush1.bf16.msra.mxu0 0
    %144 = vmatprep.subr.bf16.mxu0 0
    %145 = vmatpush1.bf16.msra.mxu0 0
    %146 = vmatprep.subr.bf16.mxu0 0
    %147 = vmatpush1.bf16.msra.mxu0 0
    %148 = vmatprep.subr.bf16.mxu0 0
    %149 = vmatpush1.bf16.msra.mxu0 0
    %150 = vmatprep.subr.bf16.mxu0 0
    %151 = vmatpush1.bf16.msra.mxu0 0
    %152 = vmatprep.subr.bf16.mxu0 0
    %153 = vmatpush1.bf16.msra.mxu0 0
    %154 = vmatprep.mubr.bf16.mxu0 0
    %155 = vmatmul.mubr.bf16.gmra.mrb[0].mxu0 %v120
    %v156 = vpop.f32.mrb[0].mxu0
    %v157 = vadd.f32 %v86, %v156
    %v158 = vpop.f32.mrb[0].mxu0
    %v159 = vadd.f32 %v90, %v158
    %v160 = vpop.f32.mrb[0].mxu0
    %v161 = vadd.f32 %v86, %v160
    %v162 = vpop.f32.mrb[0].mxu0
    %v163 = vadd.f32 %v90, %v162
    %164 = vdwg.mxu0
    %v165 = vld [vmem:[%s3] sm:$0x1]
    %v166 = vld [vmem:[%s4] sm:$0x1]
    %167 = vadd.xlane.f32.xlu0 %v157
    %v168 = vpop.xlane.xlu0 %167
    %169 = vadd.xlane.f32.xlu0 %v161
    %v170 = vpop.xlane.xlu0 %169
    %v171 = vmul.f32 %v168, 0.015625
    %v172 = vmul.f32 %v170, 0.015625
    %v173 = vmul.f32 %v157, %v157
    %v174 = vmul.f32 %v161, %v161
    %175 = vadd.xlane.f32.xlu0 %v173
    %v176 = vpop.xlane.xlu0 %175
    %177 = vadd.xlane.f32.xlu0 %v174
    %v178 = vpop.xlane.xlu0 %177
    %v179 = vmul.f32 %v176, 0.015625
    %v180 = vmul.f32 %v178, 0.015625
    %v181 = vmul.f32 %v171, %v171
    %v182 = vmul.f32 %v172, %v172
    %v183 = vsub.f32 %v179, %v181
    %v184 = vsub.f32 %v180, %v182
    %v185 = vmax.f32 %v183, 0.0
    %v186 = vmax.f32 %v184, 0.0
    %v187 = vsub.f32 %v157, %v171
    %v188 = vsub.f32 %v161, %v172
    %v189 = vadd.f32 %v185, 1e-05
    %v190 = vadd.f32 %v186, 1e-05
    %v191 = vrsqrt.pop %v189
    %v192 = vrsqrt.pop %v190
    %v193 = vmul.f32 %v187, %v191
    %v194 = vmul.f32 %v188, %v192
    %v196 = vlaneseq
    %v197 = vshrl.u32 %v196, 7
    %v198 = vsub.s32 0, %v197
    %v199 = vrot.slane %v165, %v198
    %v201 = vmul.f32 %v193, %v199
    %v202 = vmul.f32 %v194, %v199
    %v204 = vlaneseq
    %v205 = vshrl.u32 %v204, 7
    %v206 = vsub.s32 0, %v205
    %v207 = vrot.slane %v166, %v206
    %v209 = vadd.f32 %v201, %v207
    %v210 = vadd.f32 %v202, %v207
    %v211 = vmul.f32 %v209, 0.5
    %v212 = vmul.f32 %v210, 0.5
    %v213 = vmul.f32 %v209, %v209
    %v214 = vmul.f32 %v210, %v210
    %v215 = vmul.f32 %v213, %v209
    %v216 = vmul.f32 %v214, %v210
    %v217 = vmul.f32 %v215, 0.044715
    %v218 = vmul.f32 %v216, 0.044715
    %v219 = vadd.f32 %v209, %v217
    %v220 = vadd.f32 %v210, %v218
    %v221 = vmul.f32 %v219, 0.7978846
    %v222 = vmul.f32 %v220, 0.7978846
    %v223 = vtanh.pop %v221
    %v224 = vtanh.pop %v222
    %v225 = vadd.f32 %v223, 1.0
    %v226 = vadd.f32 %v224, 1.0
    %v227 = vmul.f32 %v211, %v225
    %v228 = vmul.f32 %v212, %v226
    %v229 = vpack.c.bf16 %v228, %v227
    %v230 = vld [vmem:[#allocation7] sm:$0xf]
    %v231 = vld [vmem:[#allocation7 + $0x4] sm:$0xf]
    %v232 = vld [vmem:[#allocation7 + $0x8] sm:$0xf]
    %v233 = vld [vmem:[#allocation7 + $0xc] sm:$0xf]
    %v234 = vld [vmem:[#allocation7 + $0x10] sm:$0xf]
    %v235 = vld [vmem:[#allocation7 + $0x14] sm:$0xf]
    %v236 = vld [vmem:[#allocation7 + $0x18] sm:$0xf]
    %v237 = vld [vmem:[#allocation7 + $0x1c] sm:$0xf]
    %v238 = vld [vmem:[#allocation7 + $0x20] sm:$0xf]
    %v239 = vld [vmem:[#allocation7 + $0x24] sm:$0xf]
    %v240 = vld [vmem:[#allocation7 + $0x28] sm:$0xf]
    %v241 = vld [vmem:[#allocation7 + $0x2c] sm:$0xf]
    %v242 = vld [vmem:[#allocation7 + $0x30] sm:$0xf]
    %v243 = vld [vmem:[#allocation7 + $0x34] sm:$0xf]
    %v244 = vld [vmem:[#allocation7 + $0x38] sm:$0xf]
    %v245 = vld [vmem:[#allocation7 + $0x3c] sm:$0xf]
    %v246 = vld [vmem:[%s6] sm:$0x1]
    %v248 = vlaneseq
    %v249 = vshrl.u32 %v248, 7
    %v250 = vsub.s32 0, %v249
    %v251 = vrot.slane %v246, %v250
    %v269 = vunpack.c.l.b16 %v230
    %v270 = vunpack.c.l.b16 %v231
    %v271 = vunpack.c.l.b16 %v232
    %v272 = vunpack.c.l.b16 %v233
    %v273 = vunpack.c.l.b16 %v234
    %v274 = vunpack.c.l.b16 %v235
    %v275 = vunpack.c.l.b16 %v236
    %v276 = vunpack.c.l.b16 %v237
    %v277 = vunpack.c.l.b16 %v238
    %v278 = vunpack.c.l.b16 %v239
    %v279 = vunpack.c.l.b16 %v240
    %v280 = vunpack.c.l.b16 %v241
    %v281 = vunpack.c.l.b16 %v242
    %v282 = vunpack.c.l.b16 %v243
    %v283 = vunpack.c.l.b16 %v244
    %v284 = vunpack.c.l.b16 %v245
    %v285 = vpack.c.b16 %v270, %v269
    %v286 = vpack.c.b16 %v272, %v271
    %v287 = vpack.c.b16 %v274, %v273
    %v288 = vpack.c.b16 %v276, %v275
    %v289 = vpack.c.b16 %v278, %v277
    %v290 = vpack.c.b16 %v280, %v279
    %v291 = vpack.c.b16 %v282, %v281
    %v292 = vpack.c.b16 %v284, %v283
    %301 = vmatprep.subr.bf16.mxu0 0
    %302 = vmatpush1.bf16.msra.mxu0 %v285
    %303 = vmatprep.subr.bf16.mxu0 0
    %304 = vmatpush1.bf16.msra.mxu0 %v286
    %305 = vmatprep.subr.bf16.mxu0 0
    %306 = vmatpush1.bf16.msra.mxu0 %v287
    %307 = vmatprep.subr.bf16.mxu0 0
    %308 = vmatpush1.bf16.msra.mxu0 %v288
    %309 = vmatprep.subr.bf16.mxu0 0
    %310 = vmatpush1.bf16.msra.mxu0 %v289
    %311 = vmatprep.subr.bf16.mxu0 0
    %312 = vmatpush1.bf16.msra.mxu0 %v290
    %313 = vmatprep.subr.bf16.mxu0 0
    %314 = vmatpush1.bf16.msra.mxu0 %v291
    %315 = vmatprep.subr.bf16.mxu0 0
    %316 = vmatpush1.bf16.msra.mxu0 %v292
    %317 = vmatprep.subr.bf16.mxu0 0
    %318 = vmatpush1.bf16.msra.mxu0 0
    %319 = vmatprep.subr.bf16.mxu0 0
    %320 = vmatpush1.bf16.msra.mxu0 0
    %321 = vmatprep.subr.bf16.mxu0 0
    %322 = vmatpush1.bf16.msra.mxu0 0
    %323 = vmatprep.subr.bf16.mxu0 0
    %324 = vmatpush1.bf16.msra.mxu0 0
    %325 = vmatprep.subr.bf16.mxu0 0
    %326 = vmatpush1.bf16.msra.mxu0 0
    %327 = vmatprep.subr.bf16.mxu0 0
    %328 = vmatpush1.bf16.msra.mxu0 0
    %329 = vmatprep.subr.bf16.mxu0 0
    %330 = vmatpush1.bf16.msra.mxu0 0
    %331 = vmatprep.subr.bf16.mxu0 0
    %332 = vmatpush1.bf16.msra.mxu0 0
    %333 = vmatprep.mubr.bf16.mxu0 0
    %334 = vmatmul.mubr.bf16.gmra.mrb[0].mxu0 %v229
    %v335 = vpop.f32.mrb[0].mxu0
    %v336 = vadd.f32 %v251, %v335
    %v337 = vpop.f32.mrb[0].mxu0
    %v338 = vpop.f32.mrb[0].mxu0
    %v339 = vadd.f32 %v251, %v338
    %v340 = vpop.f32.mrb[0].mxu0
    %341 = vdwg.mxu0
    %v342 = vld [vmem:[%s7] sm:$0x1]
    %v343 = vld [vmem:[%s8] sm:$0x1]
    %344 = vadd.xlane.f32.xlu0 %v336
    %v345 = vpop.xlane.xlu0 %344
    %346 = vadd.xlane.f32.xlu0 %v339
    %v347 = vpop.xlane.xlu0 %346
    %v348 = vmul.f32 %v345, 0.015625
    %v349 = vmul.f32 %v347, 0.015625
    %v350 = vmul.f32 %v336, %v336
    %v351 = vmul.f32 %v339, %v339
    %352 = vadd.xlane.f32.xlu0 %v350
    %v353 = vpop.xlane.xlu0 %352
    %354 = vadd.xlane.f32.xlu0 %v351
    %v355 = vpop.xlane.xlu0 %354
    %v356 = vmul.f32 %v353, 0.015625
    %v357 = vmul.f32 %v355, 0.015625
    %v358 = vmul.f32 %v348, %v348
    %v359 = vmul.f32 %v349, %v349
    %v360 = vsub.f32 %v356, %v358
    %v361 = vsub.f32 %v357, %v359
    %v362 = vmax.f32 %v360, 0.0
    %v363 = vmax.f32 %v361, 0.0
    %v364 = vsub.f32 %v336, %v348
    %v365 = vsub.f32 %v339, %v349
    %v366 = vadd.f32 %v362, 1e-05
    %v367 = vadd.f32 %v363, 1e-05
    %v368 = vrsqrt.pop %v366
    %v369 = vrsqrt.pop %v367
    %v370 = vmul.f32 %v364, %v368
    %v371 = vmul.f32 %v365, %v369
    %v373 = vlaneseq
    %v374 = vshrl.u32 %v373, 7
    %v375 = vsub.s32 0, %v374
    %v376 = vrot.slane %v342, %v375
    %v378 = vmul.f32 %v370, %v376
    %v379 = vmul.f32 %v371, %v376
    %v381 = vlaneseq
    %v382 = vshrl.u32 %v381, 7
    %v383 = vsub.s32 0, %v382
    %v384 = vrot.slane %v343, %v383
    %v386 = vadd.f32 %v378, %v384
    %v387 = vadd.f32 %v379, %v384
    %v388 = vadd.f32 %v386, %v159
    %v389 = vadd.f32 %v387, %v163
    %v390 = vmul.f32 %v388, 0.5
    %v391 = vmul.f32 %v389, 0.5
    %v392 = vmul.f32 %v388, %v388
    %v393 = vmul.f32 %v389, %v389
    %v394 = vmul.f32 %v392, %v388
    %v395 = vmul.f32 %v393, %v389
    %v396 = vmul.f32 %v394, 0.044715
    %v397 = vmul.f32 %v395, 0.044715
    %v398 = vadd.f32 %v388, %v396
    %v399 = vadd.f32 %v389, %v397
    %v400 = vmul.f32 %v398, 0.7978846
    %v401 = vmul.f32 %v399, 0.7978846
    %v402 = vtanh.pop %v400
    %v403 = vtanh.pop %v401
    %v404 = vadd.f32 %v402, 1.0
    %v405 = vadd.f32 %v403, 1.0
    %v406 = vmul.f32 %v390, %v404
    %v407 = vmul.f32 %v391, %v405
    %408 = vst [vmem:[#allocation8] sm:$0xff] %v406
    %409 = vst [vmem:[#allocation8 + $0x8] sm:$0xff] %v407
    // Predicated region
    $region50: #{tpu_custom_call.1} parent=1 // pred_check
      _
    $region51: #{tpu_custom_call.1} parent=1 // pred_check_branch
      %411 = sbr.rel (0) target = $region53
    $region52: #{tpu_custom_call.1} parent=1 // pred_region
      %s413 = ssub.s32 256, 256
      %414 = vsyncadd [#allocation4], %s413
      %s415 = sshll.u32 [#allocation8], 4
      %s416 = int_to_ptr.vmem [resolvable:$true] %s415
      %421 = dma.vmem_to_hbm [thread:$0]  %s416, 256, %s9, [#allocation4], 128, 128, 8
    $region53: #{tpu_custom_call.1} parent=1 // pred_fallthru
      _
    // Predicated region
    $region54: #{tpu_custom_call.1} parent=1 // pred_check
      _
    $region55: #{tpu_custom_call.1} parent=1 // pred_check_branch
      %423 = sbr.rel (0) target = $region57
    $region56: #{tpu_custom_call.1} parent=1 // pred_region
      %424 = dma.done [#allocation4], 256
    $region57: #{tpu_custom_call.1} parent=1 // pred_fallthru
      _
    %425 = vsyncpa [#allocation3], 1
    %426 = vsyncpa [#allocation6], 1
    %427 = vsyncpa [#allocation4], 1

// kernel: tpu_custom_call.1
$region0: #{tpu_custom_call.1}
  #allocation0 [shape = 'u32[]', space=smem, size = 0x4, offset = 0x4, fixed_abs, tag = 'smem constant byte address 0x4 - core index']
  #allocation1 [shape = 'u32[144,128]{1,0:T(1,128)}', space=vmem, size = 0x12000, scoped, tag = 'internal scratch']
  %s0 = inlined_call_operand.hbm [shape: bf16[16,32], index: 0, kind: input, shape index: {}]
  %s1 = inlined_call_operand.hbm [shape: bf16[32,256], index: 1, kind: input, shape index: {}]
  %s2 = inlined_call_operand.vmem [shape: f32[1,256], index: 2, kind: input, shape index: {}]
  %s3 = inlined_call_operand.vmem [shape: f32[1,128], index: 3, kind: input, shape index: {}]
  %s4 = inlined_call_operand.vmem [shape: f32[1,128], index: 4, kind: input, shape index: {}]
  %s5 = inlined_call_operand.hbm [shape: bf16[128,128], index: 5, kind: input, shape index: {}]
  %s6 = inlined_call_operand.vmem [shape: f32[1,128], index: 6, kind: input, shape index: {}]
  %s7 = inlined_call_operand.vmem [shape: f32[1,128], index: 7, kind: input, shape index: {}]
  %s8 = inlined_call_operand.vmem [shape: f32[1,128], index: 8, kind: input, shape index: {}]
  %s9 = inlined_call_operand.hbm [shape: f32[16,128], index: 9, kind: output, shape index: {}]
  %s10 = sld [smem:[#allocation0]]
  $region58: #{tpu_custom_call.1} parent=0
    _
  %s12 = ssub.s32 1, %s10
  %s13 = scalar_select 0, %s12, %s10
  $region1: #{tpu_custom_call.1} parent=0
    #allocation2 [shape = 'u8[4096]{0}', space=vmem, size = 0x1000, scoped, tag = 'input window, operand 0, single buffered']
    #allocation3 [shape = 's32[1]{0}', space=sflag, size = 0x4, scoped, tag = 'scoped memory for tpu_custom_call.1']
    #allocation4 [shape = 's32[1]{0}', space=sflag, size = 0x4, scoped, tag = 'scoped memory for tpu_custom_call.1']
    #allocation5 [shape = 'u8[16384]{0}', space=vmem, size = 0x4000, scoped, tag = 'input window, operand 1, single buffered']
    #allocation6 [shape = 's32[1]{0}', space=sflag, size = 0x4, scoped, tag = 'scoped memory for tpu_custom_call.1']
    #allocation7 [shape = 'u8[32768]{0}', space=vmem, size = 0x8000, scoped, tag = 'input window, operand 5, single buffered']
    #allocation8 [shape = 'u8[8192]{0}', space=vmem, size = 0x2000, scoped, tag = 'output window, operand 0, single buffered']
    %14 = vsyncpa [#allocation3], 0
    %15 = vsyncpa [#allocation6], 0
    %16 = vsyncpa [#allocation4], 0
    // Predicated region
    $region2: #{tpu_custom_call.1} parent=1 // pred_check
      _
    $region3: #{tpu_custom_call.1} parent=1 // pred_check_branch
      %18 = sbr.rel (0) target = $region5
    $region4: #{tpu_custom_call.1} parent=1 // pred_region
      %s20 = ssub.s32 128, 128
      %21 = vsyncadd [#allocation3], %s20
      %s22 = sshll.u32 [#allocation2], 4
      %s23 = int_to_ptr.vmem [resolvable:$true] %s22
      %28 = dma.hbm_to_vmem [thread:$0]  %s0, 128, %s23, [#allocation3], 64, 64, 4
    $region5: #{tpu_custom_call.1} parent=1 // pred_fallthru
      _
    // Predicated region
    $region6: #{tpu_custom_call.1} parent=1 // pred_check
      _
    $region7: #{tpu_custom_call.1} parent=1 // pred_check_branch
      %30 = sbr.rel (0) target = $region9
    $region8: #{tpu_custom_call.1} parent=1 // pred_region
      %s32 = ssub.s32 512, 512
      %33 = vsyncadd [#allocation6], %s32
      %s34 = sshll.u32 [#allocation5], 4
      %s35 = int_to_ptr.vmem [resolvable:$true] %s34
      %40 = dma.hbm_to_vmem [thread:$0]  %s1, 512, %s35, [#allocation6], 128, 128, 8
    $region9: #{tpu_custom_call.1} parent=1 // pred_fallthru
      _
    // Predicated region
    $region10: #{tpu_custom_call.1} parent=1 // pred_check
      _
    $region11: #{tpu_custom_call.1} parent=1 // pred_check_branch
      %42 = sbr.rel (0) target = $region13
    $region12: #{tpu_custom_call.1} parent=1 // pred_region
      _
    $region13: #{tpu_custom_call.1} parent=1 // pred_fallthru
      _
    // Predicated region
    $region14: #{tpu_custom_call.1} parent=1 // pred_check
      _
    $region15: #{tpu_custom_call.1} parent=1 // pred_check_branch
      %44 = sbr.rel (0) target = $region17
    $region16: #{tpu_custom_call.1} parent=1 // pred_region
      _
    $region17: #{tpu_custom_call.1} parent=1 // pred_fallthru
      _
    // Predicated region
    $region18: #{tpu_custom_call.1} parent=1 // pred_check
      _
    $region19: #{tpu_custom_call.1} parent=1 // pred_check_branch
      %46 = sbr.rel (0) target = $region21
    $region20: #{tpu_custom_call.1} parent=1 // pred_region
      _
    $region21: #{tpu_custom_call.1} parent=1 // pred_fallthru
      _
    // Predicated region
    $region22: #{tpu_custom_call.1} parent=1 // pred_check
      _
    $region23: #{tpu_custom_call.1} parent=1 // pred_check_branch
      %48 = sbr.rel (0) target = $region25
    $region24: #{tpu_custom_call.1} parent=1 // pred_region
      %s50 = ssub.s32 1024, 1024
      %51 = vsyncadd [#allocation6], %s50
      %s52 = sshll.u32 [#allocation7], 4
      %s53 = int_to_ptr.vmem [resolvable:$true] %s52
      %58 = dma.hbm_to_vmem [thread:$0]  %s5, 1024, %s53, [#allocation6], 64, 64, 4
    $region25: #{tpu_custom_call.1} parent=1 // pred_fallthru
      _
    // Predicated region
    $region26: #{tpu_custom_call.1} parent=1 // pred_check
      _
    $region27: #{tpu_custom_call.1} parent=1 // pred_check_branch
      %60 = sbr.rel (0) target = $region29
    $region28: #{tpu_custom_call.1} parent=1 // pred_region
      _
    $region29: #{tpu_custom_call.1} parent=1 // pred_fallthru
      _
    // Predicated region
    $region30: #{tpu_custom_call.1} parent=1 // pred_check
      _
    $region31: #{tpu_custom_call.1} parent=1 // pred_check_branch
      %62 = sbr.rel (0) target = $region33
    $region32: #{tpu_custom_call.1} parent=1 // pred_region
      _
    $region33: #{tpu_custom_call.1} parent=1 // pred_fallthru
      _
    // Predicated region
    $region34: #{tpu_custom_call.1} parent=1 // pred_check
      _
    $region35: #{tpu_custom_call.1} parent=1 // pred_check_branch
      %64 = sbr.rel (0) target = $region37
    $region36: #{tpu_custom_call.1} parent=1 // pred_region
      _
    $region37: #{tpu_custom_call.1} parent=1 // pred_fallthru
      _
    // Predicated region
    $region38: #{tpu_custom_call.1} parent=1 // pred_check
      _
    $region39: #{tpu_custom_call.1} parent=1 // pred_check_branch
      %66 = sbr.rel (0) target = $region41
    $region40: #{tpu_custom_call.1} parent=1 // pred_region
      %67 = dma.done [#allocation3], 128
    $region41: #{tpu_custom_call.1} parent=1 // pred_fallthru
      _
    // Predicated region
    $region42: #{tpu_custom_call.1} parent=1 // pred_check
      _
    $region43: #{tpu_custom_call.1} parent=1 // pred_check_branch
      %69 = sbr.rel (0) target = $region45
    $region44: #{tpu_custom_call.1} parent=1 // pred_region
      %70 = dma.done [#allocation6], 512
    $region45: #{tpu_custom_call.1} parent=1 // pred_fallthru
      _
    // Predicated region
    $region46: #{tpu_custom_call.1} parent=1 // pred_check
      _
    $region47: #{tpu_custom_call.1} parent=1 // pred_check_branch
      %72 = sbr.rel (0) target = $region49
    $region48: #{tpu_custom_call.1} parent=1 // pred_region
      %73 = dma.done [#allocation6], 1024
    $region49: #{tpu_custom_call.1} parent=1 // pred_fallthru
      _
    %v75 = vld [vmem:[#allocation2] sm:$0xf]
    %v76 = vld [vmem:[#allocation2 + $0x4] sm:$0xf]
    %v77 = vld [vmem:[#allocation5] sm:$0xff]
    %v78 = vld [vmem:[#allocation5 + $0x8] sm:$0xff]
    %v79 = vld [vmem:[#allocation5 + $0x10] sm:$0xff]
    %v80 = vld [vmem:[#allocation5 + $0x18] sm:$0xff]
    %v81 = vld [vmem:[%s2] sm:$0x3]
    %v83 = vlaneseq
    %v84 = vshrl.u32 %v83, 7
    %v85 = vsub.s32 0, %v84
    %v86 = vrot.slane %v81, %v85
    %v87 = vlaneseq
    %v88 = vshrl.u32 %v87, 7
    %v89 = vsub.s32 1, %v88
    %v90 = vrot.slane %v81, %v89
    %v95 = vunpack.c.l.b16 %v75
    %v96 = vunpack.c.l.b16 %v76
    %v97 = vpack.c.b16 %v96, %v95
    %v102 = vunpack.c.l.b16 %v77
    %v103 = vunpack.c.h.b16 %v77
    %v104 = vunpack.c.l.b16 %v78
    %v105 = vunpack.c.h.b16 %v78
    %v106 = vunpack.c.l.b16 %v79
    %v107 = vunpack.c.h.b16 %v79
    %v108 = vunpack.c.l.b16 %v80
    %v109 = vunpack.c.h.b16 %v80
    %v110 = vpack.c.b16 %v104, %v102
    %v111 = vpack.c.b16 %v105, %v103
    %v112 = vpack.c.b16 %v108, %v106
    %v113 = vpack.c.b16 %v109, %v107
    %vm118 = vcmask 261120
    %v120 = vsel %vm118, %v97, 0
    %122 = vmatprep.subr.bf16.mxu0 %v111
    %123 = vmatpush1.bf16.msra.mxu0 %v110
    %124 = vmatprep.subr.bf16.mxu0 %v113
    %125 = vmatpush1.bf16.msra.mxu0 %v112
    %126 = vmatprep.subr.bf16.mxu0 0
    %127 = vmatpush1.bf16.msra.mxu0 0
    %128 = vmatprep.subr.bf16.mxu0 0
    %129 = vmatpush1.bf16.msra.mxu0 0
    %130 = vmatprep.subr.bf16.mxu0 0
    %131 = vmatpush1.bf16.msra.mxu0 0
    %132 = vmatprep.subr.bf16.mxu0 0
    %133 = vmatpush1.bf16.msra.mxu0 0
    %134 = vmatprep.subr.bf16.mxu0 0
    %135 = vmatpush1.bf16.msra.mxu0 0
    %136 = vmatprep.subr.bf16.mxu0 0
    %137 = vmatpush1.bf16.msra.mxu0 0
    %138 = vmatprep.subr.bf16.mxu0 0
    %139 = vmatpush1.bf16.msra.mxu0 0
    %140 = vmatprep.subr.bf16.mxu0 0
    %141 = vmatpush1.bf16.msra.mxu0 0
    %142 = vmatprep.subr.bf16.mxu0 0
    %143 = vmatpush1.bf16.msra.mxu0 0
    %144 = vmatprep.subr.bf16.mxu0 0
    %145 = vmatpush1.bf16.msra.mxu0 0
    %146 = vmatprep.subr.bf16.mxu0 0
    %147 = vmatpush1.bf16.msra.mxu0 0
    %148 = vmatprep.subr.bf16.mxu0 0
    %149 = vmatpush1.bf16.msra.mxu0 0
    %150 = vmatprep.subr.bf16.mxu0 0
    %151 = vmatpush1.bf16.msra.mxu0 0
    %152 = vmatprep.subr.bf16.mxu0 0
    %153 = vmatpush1.bf16.msra.mxu0 0
    %154 = vmatprep.mubr.bf16.mxu0 0
    %155 = vmatmul.mubr.bf16.gmra.mrb[0].mxu0 %v120
    %v156 = vpop.f32.mrb[0].mxu0
    %v157 = vadd.f32 %v86, %v156
    %v158 = vpop.f32.mrb[0].mxu0
    %v159 = vadd.f32 %v90, %v158
    %v160 = vpop.f32.mrb[0].mxu0
    %v161 = vadd.f32 %v86, %v160
    %v162 = vpop.f32.mrb[0].mxu0
    %v163 = vadd.f32 %v90, %v162
    %164 = vdwg.mxu0
    %v165 = vld [vmem:[%s3] sm:$0x1]
    %v166 = vld [vmem:[%s4] sm:$0x1]
    %167 = vadd.xlane.f32.xlu0 %v157
    %v168 = vpop.xlane.xlu0 %167
    %169 = vadd.xlane.f32.xlu0 %v161
    %v170 = vpop.xlane.xlu0 %169
    %v171 = vmul.f32 %v168, 0.015625
    %v172 = vmul.f32 %v170, 0.015625
    %v173 = vmul.f32 %v157, %v157
    %v174 = vmul.f32 %v161, %v161
    %175 = vadd.xlane.f32.xlu0 %v173
    %v176 = vpop.xlane.xlu0 %175
    %177 = vadd.xlane.f32.xlu0 %v174
    %v178 = vpop.xlane.xlu0 %177
    %v179 = vmul.f32 %v176, 0.015625
    %v180 = vmul.f32 %v178, 0.015625
    %v181 = vmul.f32 %v171, %v171
    %v182 = vmul.f32 %v172, %v172
    %v183 = vsub.f32 %v179, %v181
    %v184 = vsub.f32 %v180, %v182
    %v185 = vmax.f32 %v183, 0.0
    %v186 = vmax.f32 %v184, 0.0
    %v187 = vsub.f32 %v157, %v171
    %v188 = vsub.f32 %v161, %v172
    %v189 = vadd.f32 %v185, 1e-05
    %v190 = vadd.f32 %v186, 1e-05
    %v191 = vrsqrt.pop %v189
    %v192 = vrsqrt.pop %v190
    %v193 = vmul.f32 %v187, %v191
    %v194 = vmul.f32 %v188, %v192
    %v196 = vlaneseq
    %v197 = vshrl.u32 %v196, 7
    %v198 = vsub.s32 0, %v197
    %v199 = vrot.slane %v165, %v198
    %v201 = vmul.f32 %v193, %v199
    %v202 = vmul.f32 %v194, %v199
    %v204 = vlaneseq
    %v205 = vshrl.u32 %v204, 7
    %v206 = vsub.s32 0, %v205
    %v207 = vrot.slane %v166, %v206
    %v209 = vadd.f32 %v201, %v207
    %v210 = vadd.f32 %v202, %v207
    %v211 = vmul.f32 %v209, 0.5
    %v212 = vmul.f32 %v210, 0.5
    %v213 = vmul.f32 %v209, %v209
    %v214 = vmul.f32 %v210, %v210
    %v215 = vmul.f32 %v213, %v209
    %v216 = vmul.f32 %v214, %v210
    %v217 = vmul.f32 %v215, 0.044715
    %v218 = vmul.f32 %v216, 0.044715
    %v219 = vadd.f32 %v209, %v217
    %v220 = vadd.f32 %v210, %v218
    %v221 = vmul.f32 %v219, 0.7978846
    %v222 = vmul.f32 %v220, 0.7978846
    %v223 = vtanh.pop %v221
    %v224 = vtanh.pop %v222
    %v225 = vadd.f32 %v223, 1.0
    %v226 = vadd.f32 %v224, 1.0
    %v227 = vmul.f32 %v211, %v225
    %v228 = vmul.f32 %v212, %v226
    %v229 = vpack.c.bf16 %v228, %v227
    %v230 = vld [vmem:[#allocation7] sm:$0xf]
    %v231 = vld [vmem:[#allocation7 + $0x4] sm:$0xf]
    %v232 = vld [vmem:[#allocation7 + $0x8] sm:$0xf]
    %v233 = vld [vmem:[#allocation7 + $0xc] sm:$0xf]
    %v234 = vld [vmem:[#allocation7 + $0x10] sm:$0xf]
    %v235 = vld [vmem:[#allocation7 + $0x14] sm:$0xf]
    %v236 = vld [vmem:[#allocation7 + $0x18] sm:$0xf]
    %v237 = vld [vmem:[#allocation7 + $0x1c] sm:$0xf]
    %v238 = vld [vmem:[#allocation7 + $0x20] sm:$0xf]
    %v239 = vld [vmem:[#allocation7 + $0x24] sm:$0xf]
    %v240 = vld [vmem:[#allocation7 + $0x28] sm:$0xf]
    %v241 = vld [vmem:[#allocation7 + $0x2c] sm:$0xf]
    %v242 = vld [vmem:[#allocation7 + $0x30] sm:$0xf]
    %v243 = vld [vmem:[#allocation7 + $0x34] sm:$0xf]
    %v244 = vld [vmem:[#allocation7 + $0x38] sm:$0xf]
    %v245 = vld [vmem:[#allocation7 + $0x3c] sm:$0xf]
    %v246 = vld [vmem:[%s6] sm:$0x1]
    %v248 = vlaneseq
    %v249 = vshrl.u32 %v248, 7
    %v250 = vsub.s32 0, %v249
    %v251 = vrot.slane %v246, %v250
    %v269 = vunpack.c.l.b16 %v230
    %v270 = vunpack.c.l.b16 %v231
    %v271 = vunpack.c.l.b16 %v232
    %v272 = vunpack.c.l.b16 %v233
    %v273 = vunpack.c.l.b16 %v234
    %v274 = vunpack.c.l.b16 %v235
    %v275 = vunpack.c.l.b16 %v236
    %v276 = vunpack.c.l.b16 %v237
    %v277 = vunpack.c.l.b16 %v238
    %v278 = vunpack.c.l.b16 %v239
    %v279 = vunpack.c.l.b16 %v240
    %v280 = vunpack.c.l.b16 %v241
    %v281 = vunpack.c.l.b16 %v242
    %v282 = vunpack.c.l.b16 %v243
    %v283 = vunpack.c.l.b16 %v244
    %v284 = vunpack.c.l.b16 %v245
    %v285 = vpack.c.b16 %v270, %v269
    %v286 = vpack.c.b16 %v272, %v271
    %v287 = vpack.c.b16 %v274, %v273
    %v288 = vpack.c.b16 %v276, %v275
    %v289 = vpack.c.b16 %v278, %v277
    %v290 = vpack.c.b16 %v280, %v279
    %v291 = vpack.c.b16 %v282, %v281
    %v292 = vpack.c.b16 %v284, %v283
    %301 = vmatprep.subr.bf16.mxu0 0
    %302 = vmatpush1.bf16.msra.mxu0 %v285
    %303 = vmatprep.subr.bf16.mxu0 0
    %304 = vmatpush1.bf16.msra.mxu0 %v286
    %305 = vmatprep.subr.bf16.mxu0 0
    %306 = vmatpush1.bf16.msra.mxu0 %v287
    %307 = vmatprep.subr.bf16.mxu0 0
    %308 = vmatpush1.bf16.msra.mxu0 %v288
    %309 = vmatprep.subr.bf16.mxu0 0
    %310 = vmatpush1.bf16.msra.mxu0 %v289
    %311 = vmatprep.subr.bf16.mxu0 0
    %312 = vmatpush1.bf16.msra.mxu0 %v290
    %313 = vmatprep.subr.bf16.mxu0 0
    %314 = vmatpush1.bf16.msra.mxu0 %v291
    %315 = vmatprep.subr.bf16.mxu0 0
    %316 = vmatpush1.bf16.msra.mxu0 %v292
    %317 = vmatprep.subr.bf16.mxu0 0
    %318 = vmatpush1.bf16.msra.mxu0 0
    %319 = vmatprep.subr.bf16.mxu0 0
    %320 = vmatpush1.bf16.msra.mxu0 0
    %321 = vmatprep.subr.bf16.mxu0 0
    %322 = vmatpush1.bf16.msra.mxu0 0
    %323 = vmatprep.subr.bf16.mxu0 0
    %324 = vmatpush1.bf16.msra.mxu0 0
    %325 = vmatprep.subr.bf16.mxu0 0
    %326 = vmatpush1.bf16.msra.mxu0 0
    %327 = vmatprep.subr.bf16.mxu0 0
    %328 = vmatpush1.bf16.msra.mxu0 0
    %329 = vmatprep.subr.bf16.mxu0 0
    %330 = vmatpush1.bf16.msra.mxu0 0
    %331 = vmatprep.subr.bf16.mxu0 0
    %332 = vmatpush1.bf16.msra.mxu0 0
    %333 = vmatprep.mubr.bf16.mxu0 0
    %334 = vmatmul.mubr.bf16.gmra.mrb[0].mxu0 %v229
    %v335 = vpop.f32.mrb[0].mxu0
    %v336 = vadd.f32 %v251, %v335
    %v337 = vpop.f32.mrb[0].mxu0
    %v338 = vpop.f32.mrb[0].mxu0
    %v339 = vadd.f32 %v251, %v338
    %v340 = vpop.f32.mrb[0].mxu0
    %341 = vdwg.mxu0
    %v342 = vld [vmem:[%s7] sm:$0x1]
    %v343 = vld [vmem:[%s8] sm:$0x1]
    %344 = vadd.xlane.f32.xlu0 %v336
    %v345 = vpop.xlane.xlu0 %344
    %346 = vadd.xlane.f32.xlu0 %v339
    %v347 = vpop.xlane.xlu0 %346
    %v348 = vmul.f32 %v345, 0.015625
    %v349 = vmul.f32 %v347, 0.015625
    %v350 = vmul.f32 %v336, %v336
    %v351 = vmul.f32 %v339, %v339
    %352 = vadd.xlane.f32.xlu0 %v350
    %v353 = vpop.xlane.xlu0 %352
    %354 = vadd.xlane.f32.xlu0 %v351
    %v355 = vpop.xlane.xlu0 %354
    %v356 = vmul.f32 %v353, 0.015625
    %v357 = vmul.f32 %v355, 0.015625
    %v358 = vmul.f32 %v348, %v348
    %v359 = vmul.f32 %v349, %v349
    %v360 = vsub.f32 %v356, %v358
    %v361 = vsub.f32 %v357, %v359
    %v362 = vmax.f32 %v360, 0.0
    %v363 = vmax.f32 %v361, 0.0
    %v364 = vsub.f32 %v336, %v348
    %v365 = vsub.f32 %v339, %v349
    %v366 = vadd.f32 %v362, 1e-05
    %v367 = vadd.f32 %v363, 1e-05
    %v368 = vrsqrt.pop %v366
    %v369 = vrsqrt.pop %v367
    %v370 = vmul.f32 %v364, %v368
    %v371 = vmul.f32 %v365, %v369
    %v373 = vlaneseq
    %v374 = vshrl.u32 %v373, 7
    %v375 = vsub.s32 0, %v374
    %v376 = vrot.slane %v342, %v375
    %v378 = vmul.f32 %v370, %v376
    %v379 = vmul.f32 %v371, %v376
    %v381 = vlaneseq
    %v382 = vshrl.u32 %v381, 7
    %v383 = vsub.s32 0, %v382
    %v384 = vrot.slane %v343, %v383
    %v386 = vadd.f32 %v378, %v384
    %v387 = vadd.f32 %v379, %v384
    %v388 = vadd.f32 %v386, %v159
    %v389 = vadd.f32 %v387, %v163
    %v390 = vmul.f32 %v388, 0.5
    %v391 = vmul.f32 %v389, 0.5
    %v392 = vmul.f32 %v388, %v388
    %v393 = vmul.f32 %v389, %v389
    %v394 = vmul.f32 %v392, %v388
    %v395 = vmul.f32 %v393, %v389
    %v396 = vmul.f32 %v394, 0.044715
    %v397 = vmul.f32 %v395, 0.044715
    %v398 = vadd.f32 %v388, %v396
    %v399 = vadd.f32 %v389, %v397
    %v400 = vmul.f32 %v398, 0.7978846
    %v401 = vmul.f32 %v399, 0.7978846
    %v402 = vtanh.pop %v400
    %v403 = vtanh.pop %v401
    %v404 = vadd.f32 %v402, 1.0
    %v405 = vadd.f32 %v403, 1.0
    %v406 = vmul.f32 %v390, %v404
    %v407 = vmul.f32 %v391, %v405
    %408 = vst [vmem:[#allocation8] sm:$0xff] %v406
    %409 = vst [vmem:[#allocation8 + $0x8] sm:$0xff] %v407
    // Predicated region
    $region50: #{tpu_custom_call.1} parent=1 // pred_check
      _
    $region51: #{tpu_custom_call.1} parent=1 // pred_check_branch
      %411 = sbr.rel (0) target = $region53
    $region52: #{tpu_custom_call.1} parent=1 // pred_region
      %s413 = ssub.s32 256, 256
      %414 = vsyncadd [#allocation4], %s413
      %s415 = sshll.u32 [#allocation8], 4
      %s416 = int_to_ptr.vmem [resolvable:$true] %s415
      %421 = dma.vmem_to_hbm [thread:$0]  %s416, 256, %s9, [#allocation4], 128, 128, 8
    $region53: #{tpu_custom_call.1} parent=1 // pred_fallthru
      _
    // Predicated region
    $region54: #{tpu_custom_call.1} parent=1 // pred_check
      _
    $region55: #{tpu_custom_call.1} parent=1 // pred_check_branch
      %423 = sbr.rel (0) target = $region57
    $region56: #{tpu_custom_call.1} parent=1 // pred_region
      %424 = dma.done [#allocation4], 256
    $region57: #{tpu_custom_call.1} parent=1 // pred_fallthru
      _
    %425 = vsyncpa [#allocation3], 1
    %426 = vsyncpa [#allocation6], 1
    %427 = vsyncpa [#allocation4], 1

</llo_original>
